<compile_context>
chip_gen: v7x
topology: tpu7x:2x2x1
jax: 0.10.0
libtpu: 0.0.40
codegen_flags: <defaults>
</compile_context>

<pallas_src>
import functools

import jax
import jax.numpy as jnp
from jax.experimental import pallas as pl
from jax.experimental.pallas import tpu as pltpu


# --------------- fused news encoder (conv + personalized attention, both encoders) ---------------

def _news_encoder_kernel(wsel_ref, x_ref, qp_ref, w_ref, b_ref, o_ref, *, t, out_len):
    """One block of T titles for either encoder (weight set chosen by the index_maps).

    x_ref : (T*out_len, win*D)  bf16  im2col'ed padded title word embeddings (pre-flattened)
    qp_ref: (T, F)              f32   personalized query projection tanh(W_q q + b), per title
    w_ref : (1, win*D, F)       bf16  im2col conv weight of the selected encoder
    b_ref : (1, 1, F)           f32   conv bias of the selected encoder
    o_ref : (T, F)              f32   news representation
    """
    del wsel_ref                                              # only used by the index_maps
    nf = o_ref.shape[1]

    # conv == one MXU matmul on the im2col'ed block: [T*L, win*D] x [win*D, F], f32 accumulate
    h = jnp.dot(x_ref[...], w_ref[0], preferred_element_type=jnp.float32) + b_ref[0]
    h = jnp.maximum(h, 0.0)                                   # relu            [T*L, F]
    h3 = h.reshape(t, out_len, nf)                            #                 [T, L, F]

    # personalized attention over title positions (query projection hoisted to the wrapper)
    qp = qp_ref[...]                                          # [T, F]
    scores = jnp.sum(h3 * qp[:, None, :], axis=-1, keepdims=True)   # [T, L, 1]
    scores = scores - jnp.max(scores, axis=1, keepdims=True)
    e = jnp.exp(scores)
    wts = e * pl.reciprocal(jnp.sum(e, axis=1, keepdims=True), approx=True)   # softmax over L
    tgt = jnp.sum(h3 * wts, axis=1)                           # [T, F]
    o_ref[...] = jnp.tanh(tgt)


def fused_news_encoders(cand_emb, clicked_emb, qp_ne, qp_ue,
                        ne_conv_w, ne_conv_b, ue_conv_w, ue_conv_b,
                        window, block_titles=32):
    """Runs the candidate-side and clicked-side news encoders in ONE pallas_call.

    cand_emb   : [B, S, L, D] candidate title word embeddings
    clicked_emb: [B, C, L, D] clicked title word embeddings
    qp_ne/qp_ue: [B, F] per-user personalized query projections for each encoder
    *_conv_w   : [F, 1, win, D] torch-layout conv weights ; *_conv_b : [F]
    Returns (news_rep [B, S, F], clicked_rep [B, C, F]).
    """
    B, S, L, D = cand_emb.shape
    C = clicked_emb.shape[1]
    F = ne_conv_b.shape[0]
    pad = (window - 1) // 2
    out_len = L + 2 * pad - window + 1            # same formula as the padded torch Conv2d
    KD = window * D
    T = block_titles

    def im2col(x):                                # [N, L, D] -> [N, out_len, win*D]
        xp = jnp.pad(x, ((0, 0), (pad, pad), (0, 0)))
        return jnp.concatenate([xp[:, w:w + out_len, :] for w in range(window)], axis=-1)

    def to_mat(w):                                # [F, 1, win, D] -> [win*D, F]
        return jnp.transpose(w[:, 0, :, :], (1, 2, 0)).reshape(KD, F)

    Nc, Nu = B * S, B * C
    nblk_c, nblk_u = pl.cdiv(Nc, T), pl.cdiv(Nu, T)
    Nc_pad, Nu_pad = nblk_c * T, nblk_u * T
    n_grid = nblk_c + nblk_u                      # always >= 2 -> shardable across 2 TCs (v7x)

    # activations: im2col, pad each section to a multiple of T, flatten to a 2-D MXU operand
    xc = jnp.pad(im2col(cand_emb.reshape(Nc, L, D)), ((0, Nc_pad - Nc), (0, 0), (0, 0)))
    xu = jnp.pad(im2col(clicked_emb.reshape(Nu, L, D)), ((0, Nu_pad - Nu), (0, 0), (0, 0)))
    x_all = jnp.concatenate([xc, xu], axis=0).reshape((Nc_pad + Nu_pad) * out_len, KD)
    x_all = x_all.astype(jnp.bfloat16)            # halves the dominant HBM stream

    # per-title query projections (tiny; broadcast instead of jnp.repeat)
    qpc = jnp.broadcast_to(qp_ne[:, None, :], (B, S, F)).reshape(Nc, F)
    qpu = jnp.broadcast_to(qp_ue[:, None, :], (B, C, F)).reshape(Nu, F)
    qp_all = jnp.concatenate([jnp.pad(qpc, ((0, Nc_pad - Nc), (0, 0))),
                              jnp.pad(qpu, ((0, Nu_pad - Nu), (0, 0)))], axis=0)

    # stacked encoder parameters: index 0 = candidate-side, index 1 = clicked-side
    w_all = jnp.stack([to_mat(ne_conv_w), to_mat(ue_conv_w)], axis=0).astype(jnp.bfloat16)
    b_all = jnp.stack([ne_conv_b.reshape(1, F), ue_conv_b.reshape(1, F)], axis=0)   # [2,1,F]

    # scalar-prefetched per-block weight selector (0 = candidate blocks, 1 = clicked blocks)
    w_sel = jnp.concatenate([jnp.zeros((nblk_c,), jnp.int32),
                             jnp.ones((nblk_u,), jnp.int32)], axis=0)

    kern = functools.partial(_news_encoder_kernel, t=T, out_len=out_len)
    out = pl.pallas_call(
        kern,
        out_shape=jax.ShapeDtypeStruct((Nc_pad + Nu_pad, F), jnp.float32),
        grid_spec=pltpu.PrefetchScalarGridSpec(
            num_scalar_prefetch=1,
            grid=(n_grid,),
            in_specs=[
                pl.BlockSpec((T * out_len, KD), lambda i, sel: (i, 0)),
                pl.BlockSpec((T, F), lambda i, sel: (i, 0)),
                pl.BlockSpec((1, KD, F), lambda i, sel: (sel[i], 0, 0)),
                pl.BlockSpec((1, 1, F), lambda i, sel: (sel[i], 0, 0)),
            ],
            out_specs=pl.BlockSpec((T, F), lambda i, sel: (i, 0)),
        ),
        compiler_params=pltpu.CompilerParams(dimension_semantics=("parallel",)),
    )(w_sel, x_all, qp_all, w_all, b_all)

    news_rep = out[:Nc].reshape(B, S, F)
    clicked_rep = out[Nc_pad:Nc_pad + Nu].reshape(B, C, F)
    return news_rep, clicked_rep


# ----------------------- fused user attention + click score -----------------------

def _user_score_kernel(clicked_ref, qp_ref, news_ref, o_ref):
    """Fused user attention (over clicked reps) + click score for one batch tile.

    clicked_ref: (Bt, C, F); qp_ref: (Bt, F); news_ref: (Bt, S, F); o_ref: (Bt, S)
    """
    h = clicked_ref[...]                                      # [Bt, C, F]
    qp = qp_ref[...]                                          # [Bt, F]
    scores = jnp.sum(h * qp[:, None, :], axis=-1, keepdims=True)   # [Bt, C, 1]
    scores = scores - jnp.max(scores, axis=1, keepdims=True)
    e = jnp.exp(scores)
    wts = e * pl.reciprocal(jnp.sum(e, axis=1, keepdims=True), approx=True)   # softmax over C
    user_rep = jnp.tanh(jnp.sum(h * wts, axis=1))             # [Bt, F]
    o_ref[...] = jnp.sum(news_ref[...] * user_rep[:, None, :], axis=-1)   # [Bt, S]


def user_attention_score(clicked_rep, qp_user, news_rep, block_b=8):
    """clicked_rep: [B, C, F]; qp_user: [B, F]; news_rep: [B, S, F] -> score [B, S]."""
    B, C, F = clicked_rep.shape
    S = news_rep.shape[1]
    # Tile over the batch once B is big enough for (8,128)-legal sub-blocks; at production
    # B this shards across the 2 TensorCores (v7x) and bounds per-block VMEM. At small B
    # (demo) a single full-array block is used.
    Bt = B if B < 2 * block_b else block_b
    nb = pl.cdiv(B, Bt)
    Bp = nb * Bt
    if Bp > B:
        clicked_rep = jnp.pad(clicked_rep, ((0, Bp - B), (0, 0), (0, 0)))
        qp_user = jnp.pad(qp_user, ((0, Bp - B), (0, 0)))
        news_rep = jnp.pad(news_rep, ((0, Bp - B), (0, 0), (0, 0)))
    out = pl.pallas_call(
        _user_score_kernel,
        out_shape=jax.ShapeDtypeStruct((Bp, S), jnp.float32),
        grid=(nb,),
        in_specs=[
            pl.BlockSpec((Bt, C, F), lambda i: (i, 0, 0)),
            pl.BlockSpec((Bt, F), lambda i: (i, 0)),
            pl.BlockSpec((Bt, S, F), lambda i: (i, 0, 0)),
        ],
        out_specs=pl.BlockSpec((Bt, S), lambda i: (i, 0)),
        compiler_params=pltpu.CompilerParams(dimension_semantics=("parallel",)),
    )(clicked_rep, qp_user, news_rep)
    return out[:B]


# ----------------------------- NPA model glue -----------------------------

def init_params(key, args):
    ks = jax.random.split(key, 15)
    nrm = lambda k, s: 0.1 * jax.random.normal(k, s, dtype=jnp.float32)
    F = args["cnn_num_filters"]; W = args["cnn_window_sizes"]
    D = args["word_embedding_dim"]; Q = args["query_vector_dim"]
    E = args["embedding_dim"]
    return {
        # user_embedding_encoder
        "user_embedding": nrm(ks[0], (args["user_num"], E)),
        "fc1_w": nrm(ks[1], (Q, E)), "fc1_b": nrm(ks[2], (Q,)),
        "fc2_w": nrm(ks[3], (Q, E)), "fc2_b": nrm(ks[4], (Q,)),
        # candidate-side news_encoder (conv + personalized attention)
        "ne_conv_w": nrm(ks[5], (F, 1, W, D)), "ne_conv_b": nrm(ks[6], (F,)),
        "ne_att_w": nrm(ks[7], (F, Q)), "ne_att_b": nrm(ks[8], (F,)),
        # user_encoder's internal news_encoder
        "ue_ne_conv_w": nrm(ks[9], (F, 1, W, D)), "ue_ne_conv_b": nrm(ks[10], (F,)),
        "ue_ne_att_w": nrm(ks[11], (F, Q)), "ue_ne_att_b": nrm(ks[12], (F,)),
        # user_encoder's user attention
        "ue_att_w": nrm(ks[13], (F, Q)), "ue_att_b": nrm(ks[14], (F,)),
    }


def npa_forward(params, tables, args, user_index, candidate_news, user_clicked_news_index):
    W = args["cnn_window_sizes"]
    word_table = tables["word_embedding"]                 # [V, D]
    title_idx = tables["news_title_word_index"]           # [num_news, L]

    cand_emb = word_table[title_idx[candidate_news]]                # [B, S, L, D]
    clicked_emb = word_table[title_idx[user_clicked_news_index]]    # [B, C, L, D]

    # user_embedding_encoder: embedding lookup + two relu(Linear)  (tiny -> plain XLA)
    u_emb = params["user_embedding"][user_index]                    # [B, E]
    user_vector = jax.nn.relu(u_emb @ params["fc1_w"].T + params["fc1_b"])     # [B, Q]
    user_vector_2 = jax.nn.relu(u_emb @ params["fc2_w"].T + params["fc2_b"])   # [B, Q]

    # hoisted personalized-query projections (identical for all titles of a user)
    qp_ne = jnp.tanh(user_vector @ params["ne_att_w"].T + params["ne_att_b"])        # [B, F]
    qp_ue = jnp.tanh(user_vector @ params["ue_ne_att_w"].T + params["ue_ne_att_b"])  # [B, F]
    qp_u = jnp.tanh(user_vector_2 @ params["ue_att_w"].T + params["ue_att_b"])       # [B, F]

    # candidate + clicked news representations in one fused pallas_call
    news_rep, clicked_rep = fused_news_encoders(
        cand_emb, clicked_emb, qp_ne, qp_ue,
        params["ne_conv_w"], params["ne_conv_b"],
        params["ue_ne_conv_w"], params["ue_ne_conv_b"], W)

    # user attention over clicked reps (query = user_vector_2) fused with
    # score = sum(news_rep * user_rep, dim=-1).view(B, -1)
    return user_attention_score(clicked_rep, qp_u, news_rep)        # [B, S]


# ----------------------------------- main -----------------------------------

if __name__ == "__main__":
    args = dict(user_num=8, embedding_dim=32, query_vector_dim=16,
                word_embedding_dim=32, cnn_num_filters=32, cnn_window_sizes=3,
                batch_size=2, sample_size=3)
    title_len = 16
    vocab = 100
    num_news = 20
    clicked = 50   # hard-coded as 50 in the reference user_encoder.forward

    key = jax.random.PRNGKey(0)
    k_param, k_word, k_title, k_user, k_cand, k_click = jax.random.split(key, 6)

    params = init_params(k_param, args)
    tables = {
        "word_embedding": 0.1 * jax.random.normal(
            k_word, (vocab, args["word_embedding_dim"]), jnp.float32),
        "news_title_word_index": jax.random.randint(
            k_title, (num_news, title_len), 0, vocab),
    }

    user_index = jax.random.randint(k_user, (args["batch_size"],), 0, args["user_num"])
    candidate_news = jax.random.randint(
        k_cand, (args["batch_size"], args["sample_size"]), 0, num_news)
    user_clicked = jax.random.randint(
        k_click, (args["batch_size"], clicked), 0, num_news)

    score = npa_forward(params, tables, args, user_index, candidate_news, user_clicked)
    score = jax.block_until_ready(score)
    assert score.shape == (args["batch_size"], args["sample_size"])
    assert bool(jnp.all(jnp.isfinite(score)))
    print("KERNEL_OK")
</pallas_src>

<mosaic_0001>
module attributes {stable_mosaic.version = 11 : i64} {
  func.func @_news_encoder_kernel(%arg0: i32, %arg1: memref<5xi32, #tpu.memory_space<smem>>, %arg2: memref<512x96xbf16, #tpu.memory_space<vmem>>, %arg3: memref<32x32xf32, #tpu.memory_space<vmem>>, %arg4: memref<1x96x32xbf16, #tpu.memory_space<vmem>>, %arg5: memref<1x1x32xf32, #tpu.memory_space<vmem>>, %arg6: memref<32x32xf32, #tpu.memory_space<vmem>>) attributes {dimension_semantics = [#tpu.dimension_semantics<parallel>], iteration_bounds = array<i64: 5>, scalar_prefetch = 1 : i64, scratch_operands = 0 : i64, tpu.core_type = #tpu.core_type<tc>, window_params = [{transform_indices = @transform_0, window_bounds = array<i64: 512, 96>}, {transform_indices = @transform_1, window_bounds = array<i64: 32, 32>}, {transform_indices = @transform_2, window_bounds = array<i64: 1, 96, 32>}, {transform_indices = @transform_3, window_bounds = array<i64: 1, 1, 32>}, {transform_indices = @transform_4, window_bounds = array<i64: 32, 32>}]} {
    %c0 = arith.constant 0 : index
    %c0_0 = arith.constant 0 : index
    %0 = vector.load %arg2[%c0, %c0_0] : memref<512x96xbf16, #tpu.memory_space<vmem>>, vector<512x96xbf16>
    %c0_1 = arith.constant 0 : index
    %c0_2 = arith.constant 0 : index
    %c0_3 = arith.constant 0 : index
    %1 = vector.load %arg4[%c0_1, %c0_2, %c0_3] : memref<1x96x32xbf16, #tpu.memory_space<vmem>>, vector<1x96x32xbf16>
    %2 = vector.shape_cast %1 : vector<1x96x32xbf16> to vector<96x32xbf16>
    %cst = arith.constant dense<0.000000e+00> : vector<512x32xf32>
    %3 = tpu.matmul %0, %2, %cst {dimension_numbers = #tpu.dot_dimension_numbers<[1], [0], [0], [1], [0, 0, 1, 1], [], []>} : vector<512x96xbf16>, vector<96x32xbf16>, vector<512x32xf32> -> vector<512x32xf32>
    %c0_4 = arith.constant 0 : index
    %c0_5 = arith.constant 0 : index
    %c0_6 = arith.constant 0 : index
    %4 = vector.load %arg5[%c0_4, %c0_5, %c0_6] : memref<1x1x32xf32, #tpu.memory_space<vmem>>, vector<1x1x32xf32>
    %5 = vector.shape_cast %4 : vector<1x1x32xf32> to vector<1x32xf32>
    %6 = vector.broadcast %5 : vector<1x32xf32> to vector<512x32xf32>
    %7 = arith.addf %3, %6 : vector<512x32xf32>
    %cst_7 = arith.constant 0.000000e+00 : f32
    %8 = vector.broadcast %cst_7 : f32 to vector<512x32xf32>
    %9 = arith.maximumf %7, %8 : vector<512x32xf32>
    %10 = vector.shape_cast %9 : vector<512x32xf32> to vector<32x16x32xf32>
    %c0_8 = arith.constant 0 : index
    %c0_9 = arith.constant 0 : index
    %11 = vector.load %arg3[%c0_8, %c0_9] : memref<32x32xf32, #tpu.memory_space<vmem>>, vector<32x32xf32>
    %12 = vector.shape_cast %11 : vector<32x32xf32> to vector<32x1x32xf32>
    %13 = vector.broadcast %12 : vector<32x1x32xf32> to vector<32x16x32xf32>
    %14 = arith.mulf %10, %13 : vector<32x16x32xf32>
    %cst_10 = arith.constant dense<0.000000e+00> : vector<32x16xf32>
    %15 = vector.multi_reduction <add>, %14, %cst_10 [2] : vector<32x16x32xf32> to vector<32x16xf32>
    %16 = vector.shape_cast %15 : vector<32x16xf32> to vector<32x16x1xf32>
    %cst_11 = arith.constant dense<0xFF800000> : vector<32x1xf32>
    %17 = vector.multi_reduction <maximumf>, %16, %cst_11 [1] : vector<32x16x1xf32> to vector<32x1xf32>
    %18 = vector.shape_cast %17 : vector<32x1xf32> to vector<32x1x1xf32>
    %19 = vector.broadcast %18 : vector<32x1x1xf32> to vector<32x16x1xf32>
    %20 = arith.subf %16, %19 : vector<32x16x1xf32>
    %21 = math.exp %20 : vector<32x16x1xf32>
    %cst_12 = arith.constant dense<0.000000e+00> : vector<32x1xf32>
    %22 = vector.multi_reduction <add>, %21, %cst_12 [1] : vector<32x16x1xf32> to vector<32x1xf32>
    %23 = vector.shape_cast %22 : vector<32x1xf32> to vector<32x1x1xf32>
    %24 = tpu.reciprocal %23 {approx = true} : vector<32x1x1xf32> -> vector<32x1x1xf32>
    %25 = vector.broadcast %24 : vector<32x1x1xf32> to vector<32x16x1xf32>
    %26 = arith.mulf %21, %25 : vector<32x16x1xf32>
    %27 = vector.broadcast %26 : vector<32x16x1xf32> to vector<32x16x32xf32>
    %28 = arith.mulf %10, %27 : vector<32x16x32xf32>
    %cst_13 = arith.constant dense<0.000000e+00> : vector<32x32xf32>
    %29 = vector.multi_reduction <add>, %28, %cst_13 [1] : vector<32x16x32xf32> to vector<32x32xf32>
    %30 = math.tanh %29 : vector<32x32xf32>
    %c0_14 = arith.constant 0 : index
    %c0_15 = arith.constant 0 : index
    %31 = vector.load %arg6[%c0_14, %c0_15] : memref<32x32xf32, #tpu.memory_space<vmem>>, vector<32x32xf32>
    tpu.vector_store %arg6[%c0_14, %c0_15], %30 {strides = array<i32>} : memref<32x32xf32, #tpu.memory_space<vmem>>, vector<32x32xf32>,
    return
  }
  func.func @transform_0(%arg0: i32, %arg1: memref<5xi32, #tpu.memory_space<smem>>) -> (i32, i32) {
    %c0_i32 = arith.constant 0 : i32
    %c0_i32_0 = arith.constant 0 : i32
    return %arg0, %c0_i32 : i32, i32
  }
  func.func @transform_1(%arg0: i32, %arg1: memref<5xi32, #tpu.memory_space<smem>>) -> (i32, i32) {
    %c0_i32 = arith.constant 0 : i32
    %c0_i32_0 = arith.constant 0 : i32
    return %arg0, %c0_i32 : i32, i32
  }
  func.func @transform_2(%arg0: i32, %arg1: memref<5xi32, #tpu.memory_space<smem>>) -> (i32, i32, i32) {
    %0 = arith.index_cast %arg0 : i32 to index
    %1 = memref.load %arg1[%0] : memref<5xi32, #tpu.memory_space<smem>>
    %c0_i32 = arith.constant 0 : i32
    %c0_i32_0 = arith.constant 0 : i32
    %c0_i32_1 = arith.constant 0 : i32
    return %1, %c0_i32, %c0_i32_0 : i32, i32, i32
  }
  func.func @transform_3(%arg0: i32, %arg1: memref<5xi32, #tpu.memory_space<smem>>) -> (i32, i32, i32) {
    %0 = arith.index_cast %arg0 : i32 to index
    %1 = memref.load %arg1[%0] : memref<5xi32, #tpu.memory_space<smem>>
    %c0_i32 = arith.constant 0 : i32
    %c0_i32_0 = arith.constant 0 : i32
    %c0_i32_1 = arith.constant 0 : i32
    return %1, %c0_i32, %c0_i32_0 : i32, i32, i32
  }
  func.func @transform_4(%arg0: i32, %arg1: memref<5xi32, #tpu.memory_space<smem>>) -> (i32, i32) {
    %c0_i32 = arith.constant 0 : i32
    %c0_i32_0 = arith.constant 0 : i32
    return %arg0, %c0_i32 : i32, i32
  }
}

</mosaic_0001>

<llo_original>
// kernel: tpu_custom_call.1
$region0: #{tpu_custom_call.1}
  #allocation0 [shape = 'u32[]', space=smem, size = 0x4, offset = 0x4, fixed_abs, tag = 'smem constant byte address 0x4 - core index']
  #allocation1 [shape = 'u32[144,128]{1,0:T(1,128)}', space=vmem, size = 0x12000, scoped, tag = 'internal scratch']
  #allocation2 [shape = 's32[1]{0}', space=sflag, size = 0x4, scoped, tag = 'scoped memory for tpu_custom_call.1']
  #allocation3 [shape = 'u8[512]{0}', space=smem, size = 0x200, scoped, tag = 'prefetched SMEM operand 0']
  %s0 = inlined_call_operand.vmem [shape: s32[5], index: 0, kind: input, shape index: {}]
  %s1 = inlined_call_operand.vmem [shape: bf16[2560,96], index: 1, kind: input, shape index: {}]
  %s2 = inlined_call_operand.vmem [shape: f32[160,32], index: 2, kind: input, shape index: {}]
  %s3 = inlined_call_operand.vmem [shape: bf16[2,96,32], index: 3, kind: input, shape index: {}]
  %s4 = inlined_call_operand.vmem [shape: f32[2,1,32], index: 4, kind: input, shape index: {}]
  %s5 = inlined_call_operand.vmem [shape: f32[160,32], index: 5, kind: output, shape index: {}]
  %s6 = sld [smem:[#allocation0]]
  $region49: #{tpu_custom_call.1} parent=0
    _
  %s8 = ssub.s32 1, %s6
  %s9 = scalar_select 0, %s8, %s6
  %s10 = sshll.u32 %s0, 4
  %s11 = int_to_ptr.vmem [resolvable:$true] %s10
  %13 = dma.vmem_to_smem %s11, 16, [#allocation3], [#allocation2]
  %14 = dma.done [#allocation2], 16
  %15 = sfence
  loop: start=0, step=1, limit=7
  $region2: #{tpu_custom_call.1} parent=0 // loop_pre_header
    _
  $region3: #{tpu_custom_call.1} parent=0 // loop_header
    %s17 = sphi 0, %s21
    %p18 = scmp.ge.s32.totalorder %s17, 7
    %s27 = sphi 0, %s29
    %s30 = sphi 0, %s27
    %s31 = sphi 0, %s30
    %s47 = sphi 0, %s31
    %s53 = sphi 0, %s55
    %s56 = sphi 0, %s53
    %s57 = sphi 0, %s56
    %s73 = sphi 0, %s57
    %s81 = sphi 0, %s83
    %s84 = sphi 0, %s81
    %s85 = sphi 0, %s84
    %s101 = sphi 0, %s85
    %s109 = sphi 0, %s111
    %s112 = sphi 0, %s109
    %s113 = sphi 0, %s112
    %s129 = sphi 0, %s113
    %s135 = sphi 0, %s137
    %s138 = sphi 0, %s135
    %s139 = sphi 0, %s138
    %s155 = sphi 0, %s139
  $region4: #{tpu_custom_call.1} parent=0 // loop_header_branch
    %20 = sbr.rel (%p18) target = $region8
  $region5: #{tpu_custom_call.1} parent=0 // loop_body
    %s22 = ssub.s32 %s17, 1
    %s23 = ssub.s32 %s17, 2
    %s24 = sadd.s32 %s17, 1
    %s25 = ssub.s32 %s17, %s24
    %p26 = scmp.eq.s32.totalorder %s25, 0
    %s28 = sadd.s32 %s27, 1
    %s29 = scalar_select %p26, %s27, %s28
    %p32 = pneg %p26
    %p33 = scmp.eq.s32.totalorder %s17, 4
    %p34 = por %p32, %p33
    %p35 = scmp.ne.s32.totalorder %s27, %s30
    %p36 = scmp.eq.s32.totalorder %s17, 0
    %p37 = por %p35, %p36
    %p38 = scmp.ne.s32.totalorder %s27, %s30
    %p39 = scmp.eq.s32.totalorder %s22, 4
    %p40 = por %p38, %p39
    %p41 = scmp.ne.s32.totalorder %s30, %s31
    %p42 = scmp.eq.s32.totalorder %s22, 0
    %p43 = por %p41, %p42
    %p44 = scmp.ne.s32.totalorder %s30, %s31
    %p45 = scmp.eq.s32.totalorder %s23, 4
    %p46 = por %p44, %p45
    %p48 = scmp.ne.s32.totalorder %s31, %s47
    %p49 = scmp.eq.s32.totalorder %s23, 0
    %p50 = por %p48, %p49
    %s51 = ssub.s32 %s17, %s24
    %p52 = scmp.eq.s32.totalorder %s51, 0
    %s54 = sadd.s32 %s53, 1
    %s55 = scalar_select %p52, %s53, %s54
    %p58 = pneg %p52
    %p59 = scmp.eq.s32.totalorder %s17, 4
    %p60 = por %p58, %p59
    %p61 = scmp.ne.s32.totalorder %s53, %s56
    %p62 = scmp.eq.s32.totalorder %s17, 0
    %p63 = por %p61, %p62
    %p64 = scmp.ne.s32.totalorder %s53, %s56
    %p65 = scmp.eq.s32.totalorder %s22, 4
    %p66 = por %p64, %p65
    %p67 = scmp.ne.s32.totalorder %s56, %s57
    %p68 = scmp.eq.s32.totalorder %s22, 0
    %p69 = por %p67, %p68
    %p70 = scmp.ne.s32.totalorder %s56, %s57
    %p71 = scmp.eq.s32.totalorder %s23, 4
    %p72 = por %p70, %p71
    %p74 = scmp.ne.s32.totalorder %s57, %s73
    %p75 = scmp.eq.s32.totalorder %s23, 0
    %p76 = por %p74, %p75
    %s77 = sld [smem:[#allocation3 + %s17]]
    %s78 = sld [smem:[#allocation3 + %s24]]
    %s79 = ssub.s32 %s77, %s78
    %p80 = scmp.eq.s32.totalorder %s79, 0
    %s82 = sadd.s32 %s81, 1
    %s83 = scalar_select %p80, %s81, %s82
    %p86 = pneg %p80
    %p87 = scmp.eq.s32.totalorder %s17, 4
    %p88 = por %p86, %p87
    %p89 = scmp.ne.s32.totalorder %s81, %s84
    %p90 = scmp.eq.s32.totalorder %s17, 0
    %p91 = por %p89, %p90
    %p92 = scmp.ne.s32.totalorder %s81, %s84
    %p93 = scmp.eq.s32.totalorder %s22, 4
    %p94 = por %p92, %p93
    %p95 = scmp.ne.s32.totalorder %s84, %s85
    %p96 = scmp.eq.s32.totalorder %s22, 0
    %p97 = por %p95, %p96
    %p98 = scmp.ne.s32.totalorder %s84, %s85
    %p99 = scmp.eq.s32.totalorder %s23, 4
    %p100 = por %p98, %p99
    %p102 = scmp.ne.s32.totalorder %s85, %s101
    %p103 = scmp.eq.s32.totalorder %s23, 0
    %p104 = por %p102, %p103
    %s105 = sld [smem:[#allocation3 + %s17]]
    %s106 = sld [smem:[#allocation3 + %s24]]
    %s107 = ssub.s32 %s105, %s106
    %p108 = scmp.eq.s32.totalorder %s107, 0
    %s110 = sadd.s32 %s109, 1
    %s111 = scalar_select %p108, %s109, %s110
    %p114 = pneg %p108
    %p115 = scmp.eq.s32.totalorder %s17, 4
    %p116 = por %p114, %p115
    %p117 = scmp.ne.s32.totalorder %s109, %s112
    %p118 = scmp.eq.s32.totalorder %s17, 0
    %p119 = por %p117, %p118
    %p120 = scmp.ne.s32.totalorder %s109, %s112
    %p121 = scmp.eq.s32.totalorder %s22, 4
    %p122 = por %p120, %p121
    %p123 = scmp.ne.s32.totalorder %s112, %s113
    %p124 = scmp.eq.s32.totalorder %s22, 0
    %p125 = por %p123, %p124
    %p126 = scmp.ne.s32.totalorder %s112, %s113
    %p127 = scmp.eq.s32.totalorder %s23, 4
    %p128 = por %p126, %p127
    %p130 = scmp.ne.s32.totalorder %s113, %s129
    %p131 = scmp.eq.s32.totalorder %s23, 0
    %p132 = por %p130, %p131
    %s133 = ssub.s32 %s17, %s24
    %p134 = scmp.eq.s32.totalorder %s133, 0
    %s136 = sadd.s32 %s135, 1
    %s137 = scalar_select %p134, %s135, %s136
    %p140 = pneg %p134
    %p141 = scmp.eq.s32.totalorder %s17, 4
    %p142 = por %p140, %p141
    %p143 = scmp.ne.s32.totalorder %s135, %s138
    %p144 = scmp.eq.s32.totalorder %s17, 0
    %p145 = por %p143, %p144
    %p146 = scmp.ne.s32.totalorder %s135, %s138
    %p147 = scmp.eq.s32.totalorder %s22, 4
    %p148 = por %p146, %p147
    %p149 = scmp.ne.s32.totalorder %s138, %s139
    %p150 = scmp.eq.s32.totalorder %s22, 0
    %p151 = por %p149, %p150
    %p152 = scmp.ne.s32.totalorder %s138, %s139
    %p153 = scmp.eq.s32.totalorder %s23, 4
    %p154 = por %p152, %p153
    %p156 = scmp.ne.s32.totalorder %s139, %s155
    %p157 = scmp.eq.s32.totalorder %s23, 0
    %p158 = por %p156, %p157
    %p159 = scmp.le.s32.totalorder 1, %s17
    %p160 = scmp.lt.s32.totalorder %s17, 6
    %p161 = pnand %p159, %p160
    %p162 = pneg %p161
    // Predicated region
    $region9: #{tpu_custom_call.1} parent=5 // pred_check
      _
    $region10: #{tpu_custom_call.1} parent=5 // pred_check_branch
      %164 = sbr.rel (%p161) target = $region12
    $region11: #{tpu_custom_call.1} parent=5 // pred_region
      %s165 = ssub.s32 %s17, 1
    $region12: #{tpu_custom_call.1} parent=5 // pred_fallthru
      _
    %p166 = scmp.lt.s32.totalorder %s17, 5
    // Predicated region
    $region13: #{tpu_custom_call.1} parent=5 // pred_check
      %p167 = pneg %p166
    $region14: #{tpu_custom_call.1} parent=5 // pred_check_branch
      %169 = sbr.rel (%p167) target = $region16
    $region15: #{tpu_custom_call.1} parent=5 // pred_region
      // Predicated region
      $region17: #{tpu_custom_call.1} parent=15 // pred_check
        %p170 = pneg %p37
      $region18: #{tpu_custom_call.1} parent=15 // pred_check_branch
        %172 = sbr.rel (%p170) target = $region20
      $region19: #{tpu_custom_call.1} parent=15 // pred_region
        %s173 = smul.u32 64, %s17
        %p174 = scmp.lt.s32.totalorder %s173, 319
        %s175 = scalar_select %p174, %s173, 319
        %s176 = smul.addr %s175, 4
        %s177 = scalar_lea.vmem %s1, %s176
        %s178 = smul.u32 64, %s17
      $region20: #{tpu_custom_call.1} parent=15 // pred_fallthru
        _
      // Predicated region
      $region21: #{tpu_custom_call.1} parent=15 // pred_check
        %p179 = pneg %p63
      $region22: #{tpu_custom_call.1} parent=15 // pred_check_branch
        %181 = sbr.rel (%p179) target = $region24
      $region23: #{tpu_custom_call.1} parent=15 // pred_region
        %s182 = smul.u32 4, %s17
        %p183 = scmp.lt.s32.totalorder %s182, 19
        %s184 = scalar_select %p183, %s182, 19
        %s185 = smul.addr %s184, 8
        %s186 = scalar_lea.vmem %s2, %s185
        %s187 = smul.u32 4, %s17
      $region24: #{tpu_custom_call.1} parent=15 // pred_fallthru
        _
      // Predicated region
      $region25: #{tpu_custom_call.1} parent=15 // pred_check
        %p188 = pneg %p91
      $region26: #{tpu_custom_call.1} parent=15 // pred_check_branch
        %190 = sbr.rel (%p188) target = $region28
      $region27: #{tpu_custom_call.1} parent=15 // pred_region
        %s191 = sld [smem:[#allocation3 + %s17]]
        %p192 = scmp.lt.s32.totalorder %s191, 1
        %s193 = scalar_select %p192, %s191, 1
        %s194 = smul.addr %s193, 12
        %s195 = smul.addr %s194, 4
        %s196 = scalar_lea.vmem %s3, %s195
        %s197 = sld [smem:[#allocation3 + %s17]]
      $region28: #{tpu_custom_call.1} parent=15 // pred_fallthru
        _
      // Predicated region
      $region29: #{tpu_custom_call.1} parent=15 // pred_check
        %p198 = pneg %p119
      $region30: #{tpu_custom_call.1} parent=15 // pred_check_branch
        %200 = sbr.rel (%p198) target = $region32
      $region31: #{tpu_custom_call.1} parent=15 // pred_region
        %s201 = sld [smem:[#allocation3 + %s17]]
        %p202 = scmp.lt.s32.totalorder %s201, 1
        %s203 = scalar_select %p202, %s201, 1
        %s204 = scalar_lea.vmem %s4, %s203
        %s205 = sld [smem:[#allocation3 + %s17]]
      $region32: #{tpu_custom_call.1} parent=15 // pred_fallthru
        _
    $region16: #{tpu_custom_call.1} parent=5 // pred_fallthru
      _
    %p206 = scmp.le.s32.totalorder 1, %s17
    %p207 = scmp.lt.s32.totalorder %s17, 6
    %p208 = pnand %p206, %p207
    %p209 = pneg %p208
    // Predicated region
    $region33: #{tpu_custom_call.1} parent=5 // pred_check
      _
    $region34: #{tpu_custom_call.1} parent=5 // pred_check_branch
      %211 = sbr.rel (%p208) target = $region36
    $region35: #{tpu_custom_call.1} parent=5 // pred_region
      %s212 = ssub.s32 %s17, 1
      %s213 = smul.u32 64, %s22
      %p214 = scmp.lt.s32.totalorder %s213, 319
      %s215 = scalar_select %p214, %s213, 319
      %s216 = smul.addr %s215, 4
      %s217 = scalar_lea.vmem %s1, %s216
      %p218 = pneg %p43
      %p219 = pneg %p40
      %s220 = smul.u32 4, %s22
      %p221 = scmp.lt.s32.totalorder %s220, 19
      %s222 = scalar_select %p221, %s220, 19
      %s223 = smul.addr %s222, 8
      %s224 = scalar_lea.vmem %s2, %s223
      %p225 = pneg %p69
      %p226 = pneg %p66
      %s227 = sld [smem:[#allocation3 + %s22]]
      %p228 = scmp.lt.s32.totalorder %s227, 1
      %s229 = scalar_select %p228, %s227, 1
      %s230 = smul.addr %s229, 12
      %s231 = smul.addr %s230, 4
      %s232 = scalar_lea.vmem %s3, %s231
      %p233 = pneg %p97
      %p234 = pneg %p94
      %s235 = sld [smem:[#allocation3 + %s22]]
      %p236 = scmp.lt.s32.totalorder %s235, 1
      %s237 = scalar_select %p236, %s235, 1
      %s238 = scalar_lea.vmem %s4, %s237
      %p239 = pneg %p125
      %p240 = pneg %p122
      %p241 = pneg %p151
      %p242 = pneg %p148
      %s243 = smul.u32 4, %s22
      %p244 = scmp.lt.s32.totalorder %s243, 19
      %s245 = scalar_select %p244, %s243, 19
      %s246 = smul.addr %s245, 8
      %s247 = scalar_lea.vmem %s5, %s246
      %s248 = smul.u32 64, %s22
      %p249 = scmp.lt.s32.totalorder %s248, 319
      %s250 = scalar_select %p249, %s248, 319
      %s251 = smul.addr %s250, 4
      %s252 = scalar_lea.vmem %s1, %s251
      %s253 = smul.u32 64, %s22
      %s254 = smul.u32 4, %s22
      %p255 = scmp.lt.s32.totalorder %s254, 19
      %s256 = scalar_select %p255, %s254, 19
      %s257 = smul.addr %s256, 8
      %s258 = scalar_lea.vmem %s2, %s257
      %s259 = smul.u32 4, %s22
      %s260 = sld [smem:[#allocation3 + %s22]]
      %p261 = scmp.lt.s32.totalorder %s260, 1
      %s262 = scalar_select %p261, %s260, 1
      %s263 = smul.addr %s262, 12
      %s264 = smul.addr %s263, 4
      %s265 = scalar_lea.vmem %s3, %s264
      %s266 = sld [smem:[#allocation3 + %s22]]
      %s267 = sld [smem:[#allocation3 + %s22]]
      %p268 = scmp.lt.s32.totalorder %s267, 1
      %s269 = scalar_select %p268, %s267, 1
      %s270 = scalar_lea.vmem %s4, %s269
      %s271 = sld [smem:[#allocation3 + %s22]]
      %s272 = smul.u32 4, %s22
      %p273 = scmp.lt.s32.totalorder %s272, 19
      %s274 = scalar_select %p273, %s272, 19
      %s275 = smul.addr %s274, 8
      %s276 = scalar_lea.vmem %s5, %s275
      %s277 = smul.u32 4, %s22
      %v279 = vld [vmem:[%s252] sm:$0xf]
      %v280 = vld [vmem:[%s252 + $0x4] sm:$0xf]
      %v281 = vld [vmem:[%s252 + $0x8] sm:$0xf]
      %v282 = vld [vmem:[%s252 + $0xc] sm:$0xf]
      %v283 = vld [vmem:[%s252 + $0x10] sm:$0xf]
      %v284 = vld [vmem:[%s252 + $0x14] sm:$0xf]
      %v285 = vld [vmem:[%s252 + $0x18] sm:$0xf]
      %v286 = vld [vmem:[%s252 + $0x1c] sm:$0xf]
      %v287 = vld [vmem:[%s252 + $0x20] sm:$0xf]
      %v288 = vld [vmem:[%s252 + $0x24] sm:$0xf]
      %v289 = vld [vmem:[%s252 + $0x28] sm:$0xf]
      %v290 = vld [vmem:[%s252 + $0x2c] sm:$0xf]
      %v291 = vld [vmem:[%s252 + $0x30] sm:$0xf]
      %v292 = vld [vmem:[%s252 + $0x34] sm:$0xf]
      %v293 = vld [vmem:[%s252 + $0x38] sm:$0xf]
      %v294 = vld [vmem:[%s252 + $0x3c] sm:$0xf]
      %v295 = vld [vmem:[%s252 + $0x40] sm:$0xf]
      %v296 = vld [vmem:[%s252 + $0x44] sm:$0xf]
      %v297 = vld [vmem:[%s252 + $0x48] sm:$0xf]
      %v298 = vld [vmem:[%s252 + $0x4c] sm:$0xf]
      %v299 = vld [vmem:[%s252 + $0x50] sm:$0xf]
      %v300 = vld [vmem:[%s252 + $0x54] sm:$0xf]
      %v301 = vld [vmem:[%s252 + $0x58] sm:$0xf]
      %v302 = vld [vmem:[%s252 + $0x5c] sm:$0xf]
      %v303 = vld [vmem:[%s252 + $0x60] sm:$0xf]
      %v304 = vld [vmem:[%s252 + $0x64] sm:$0xf]
      %v305 = vld [vmem:[%s252 + $0x68] sm:$0xf]
      %v306 = vld [vmem:[%s252 + $0x6c] sm:$0xf]
      %v307 = vld [vmem:[%s252 + $0x70] sm:$0xf]
      %v308 = vld [vmem:[%s252 + $0x74] sm:$0xf]
      %v309 = vld [vmem:[%s252 + $0x78] sm:$0xf]
      %v310 = vld [vmem:[%s252 + $0x7c] sm:$0xf]
      %v311 = vld [vmem:[%s252 + $0x80] sm:$0xf]
      %v312 = vld [vmem:[%s252 + $0x84] sm:$0xf]
      %v313 = vld [vmem:[%s252 + $0x88] sm:$0xf]
      %v314 = vld [vmem:[%s252 + $0x8c] sm:$0xf]
      %v315 = vld [vmem:[%s252 + $0x90] sm:$0xf]
      %v316 = vld [vmem:[%s252 + $0x94] sm:$0xf]
      %v317 = vld [vmem:[%s252 + $0x98] sm:$0xf]
      %v318 = vld [vmem:[%s252 + $0x9c] sm:$0xf]
      %v319 = vld [vmem:[%s252 + $0xa0] sm:$0xf]
      %v320 = vld [vmem:[%s252 + $0xa4] sm:$0xf]
      %v321 = vld [vmem:[%s252 + $0xa8] sm:$0xf]
      %v322 = vld [vmem:[%s252 + $0xac] sm:$0xf]
      %v323 = vld [vmem:[%s252 + $0xb0] sm:$0xf]
      %v324 = vld [vmem:[%s252 + $0xb4] sm:$0xf]
      %v325 = vld [vmem:[%s252 + $0xb8] sm:$0xf]
      %v326 = vld [vmem:[%s252 + $0xbc] sm:$0xf]
      %v327 = vld [vmem:[%s252 + $0xc0] sm:$0xf]
      %v328 = vld [vmem:[%s252 + $0xc4] sm:$0xf]
      %v329 = vld [vmem:[%s252 + $0xc8] sm:$0xf]
      %v330 = vld [vmem:[%s252 + $0xcc] sm:$0xf]
      %v331 = vld [vmem:[%s252 + $0xd0] sm:$0xf]
      %v332 = vld [vmem:[%s252 + $0xd4] sm:$0xf]
      %v333 = vld [vmem:[%s252 + $0xd8] sm:$0xf]
      %v334 = vld [vmem:[%s252 + $0xdc] sm:$0xf]
      %v335 = vld [vmem:[%s252 + $0xe0] sm:$0xf]
      %v336 = vld [vmem:[%s252 + $0xe4] sm:$0xf]
      %v337 = vld [vmem:[%s252 + $0xe8] sm:$0xf]
      %v338 = vld [vmem:[%s252 + $0xec] sm:$0xf]
      %v339 = vld [vmem:[%s252 + $0xf0] sm:$0xf]
      %v340 = vld [vmem:[%s252 + $0xf4] sm:$0xf]
      %v341 = vld [vmem:[%s252 + $0xf8] sm:$0xf]
      %v342 = vld [vmem:[%s252 + $0xfc] sm:$0xf]
      %v343 = vld [vmem:[%s265] sm:$0xf]
      %v344 = vld [vmem:[%s265 + $0x4] sm:$0xf]
      %v345 = vld [vmem:[%s265 + $0x8] sm:$0xf]
      %v346 = vld [vmem:[%s265 + $0xc] sm:$0xf]
      %v347 = vld [vmem:[%s265 + $0x10] sm:$0xf]
      %v348 = vld [vmem:[%s265 + $0x14] sm:$0xf]
      %v349 = vld [vmem:[%s265 + $0x18] sm:$0xf]
      %v350 = vld [vmem:[%s265 + $0x1c] sm:$0xf]
      %v351 = vld [vmem:[%s265 + $0x20] sm:$0xf]
      %v352 = vld [vmem:[%s265 + $0x24] sm:$0xf]
      %v353 = vld [vmem:[%s265 + $0x28] sm:$0xf]
      %v354 = vld [vmem:[%s265 + $0x2c] sm:$0xf]
      %v355 = vld [vmem:[%s270] sm:$0x1]
      %v357 = vlaneseq
      %v358 = vshrl.u32 %v357, 7
      %v359 = vsub.s32 0, %v358
      %v360 = vrot.slane %v355, %v359
      %v426 = vunpack.c.l.b16 %v279
      %v427 = vunpack.c.l.b16 %v280
      %v428 = vunpack.c.l.b16 %v281
      %v429 = vunpack.c.l.b16 %v282
      %v430 = vunpack.c.l.b16 %v283
      %v431 = vunpack.c.l.b16 %v284
      %v432 = vunpack.c.l.b16 %v285
      %v433 = vunpack.c.l.b16 %v286
      %v434 = vunpack.c.l.b16 %v287
      %v435 = vunpack.c.l.b16 %v288
      %v436 = vunpack.c.l.b16 %v289
      %v437 = vunpack.c.l.b16 %v290
      %v438 = vunpack.c.l.b16 %v291
      %v439 = vunpack.c.l.b16 %v292
      %v440 = vunpack.c.l.b16 %v293
      %v441 = vunpack.c.l.b16 %v294
      %v442 = vunpack.c.l.b16 %v295
      %v443 = vunpack.c.l.b16 %v296
      %v444 = vunpack.c.l.b16 %v297
      %v445 = vunpack.c.l.b16 %v298
      %v446 = vunpack.c.l.b16 %v299
      %v447 = vunpack.c.l.b16 %v300
      %v448 = vunpack.c.l.b16 %v301
      %v449 = vunpack.c.l.b16 %v302
      %v450 = vunpack.c.l.b16 %v303
      %v451 = vunpack.c.l.b16 %v304
      %v452 = vunpack.c.l.b16 %v305
      %v453 = vunpack.c.l.b16 %v306
      %v454 = vunpack.c.l.b16 %v307
      %v455 = vunpack.c.l.b16 %v308
      %v456 = vunpack.c.l.b16 %v309
      %v457 = vunpack.c.l.b16 %v310
      %v458 = vunpack.c.l.b16 %v311
      %v459 = vunpack.c.l.b16 %v312
      %v460 = vunpack.c.l.b16 %v313
      %v461 = vunpack.c.l.b16 %v314
      %v462 = vunpack.c.l.b16 %v315
      %v463 = vunpack.c.l.b16 %v316
      %v464 = vunpack.c.l.b16 %v317
      %v465 = vunpack.c.l.b16 %v318
      %v466 = vunpack.c.l.b16 %v319
      %v467 = vunpack.c.l.b16 %v320
      %v468 = vunpack.c.l.b16 %v321
      %v469 = vunpack.c.l.b16 %v322
      %v470 = vunpack.c.l.b16 %v323
      %v471 = vunpack.c.l.b16 %v324
      %v472 = vunpack.c.l.b16 %v325
      %v473 = vunpack.c.l.b16 %v326
      %v474 = vunpack.c.l.b16 %v327
      %v475 = vunpack.c.l.b16 %v328
      %v476 = vunpack.c.l.b16 %v329
      %v477 = vunpack.c.l.b16 %v330
      %v478 = vunpack.c.l.b16 %v331
      %v479 = vunpack.c.l.b16 %v332
      %v480 = vunpack.c.l.b16 %v333
      %v481 = vunpack.c.l.b16 %v334
      %v482 = vunpack.c.l.b16 %v335
      %v483 = vunpack.c.l.b16 %v336
      %v484 = vunpack.c.l.b16 %v337
      %v485 = vunpack.c.l.b16 %v338
      %v486 = vunpack.c.l.b16 %v339
      %v487 = vunpack.c.l.b16 %v340
      %v488 = vunpack.c.l.b16 %v341
      %v489 = vunpack.c.l.b16 %v342
      %v490 = vpack.c.b16 %v427, %v426
      %v491 = vpack.c.b16 %v429, %v428
      %v492 = vpack.c.b16 %v431, %v430
      %v493 = vpack.c.b16 %v433, %v432
      %v494 = vpack.c.b16 %v435, %v434
      %v495 = vpack.c.b16 %v437, %v436
      %v496 = vpack.c.b16 %v439, %v438
      %v497 = vpack.c.b16 %v441, %v440
      %v498 = vpack.c.b16 %v443, %v442
      %v499 = vpack.c.b16 %v445, %v444
      %v500 = vpack.c.b16 %v447, %v446
      %v501 = vpack.c.b16 %v449, %v448
      %v502 = vpack.c.b16 %v451, %v450
      %v503 = vpack.c.b16 %v453, %v452
      %v504 = vpack.c.b16 %v455, %v454
      %v505 = vpack.c.b16 %v457, %v456
      %v506 = vpack.c.b16 %v459, %v458
      %v507 = vpack.c.b16 %v461, %v460
      %v508 = vpack.c.b16 %v463, %v462
      %v509 = vpack.c.b16 %v465, %v464
      %v510 = vpack.c.b16 %v467, %v466
      %v511 = vpack.c.b16 %v469, %v468
      %v512 = vpack.c.b16 %v471, %v470
      %v513 = vpack.c.b16 %v473, %v472
      %v514 = vpack.c.b16 %v475, %v474
      %v515 = vpack.c.b16 %v477, %v476
      %v516 = vpack.c.b16 %v479, %v478
      %v517 = vpack.c.b16 %v481, %v480
      %v518 = vpack.c.b16 %v483, %v482
      %v519 = vpack.c.b16 %v485, %v484
      %v520 = vpack.c.b16 %v487, %v486
      %v521 = vpack.c.b16 %v489, %v488
      %v534 = vunpack.c.l.b16 %v343
      %v535 = vunpack.c.l.b16 %v344
      %v536 = vunpack.c.l.b16 %v345
      %v537 = vunpack.c.l.b16 %v346
      %v538 = vunpack.c.l.b16 %v347
      %v539 = vunpack.c.l.b16 %v348
      %v540 = vunpack.c.l.b16 %v349
      %v541 = vunpack.c.l.b16 %v350
      %v542 = vunpack.c.l.b16 %v351
      %v543 = vunpack.c.l.b16 %v352
      %v544 = vunpack.c.l.b16 %v353
      %v545 = vunpack.c.l.b16 %v354
      %v546 = vpack.c.b16 %v535, %v534
      %v547 = vpack.c.b16 %v537, %v536
      %v548 = vpack.c.b16 %v539, %v538
      %v549 = vpack.c.b16 %v541, %v540
      %v550 = vpack.c.b16 %v543, %v542
      %v551 = vpack.c.b16 %v545, %v544
      %vm558 = vcmask 785408
      %v560 = vsel %vm558, %v490, 0
      %v563 = vsel %vm558, %v491, 0
      %v566 = vsel %vm558, %v492, 0
      %v569 = vsel %vm558, %v493, 0
      %v572 = vsel %vm558, %v494, 0
      %v575 = vsel %vm558, %v495, 0
      %v578 = vsel %vm558, %v496, 0
      %v581 = vsel %vm558, %v497, 0
      %v584 = vsel %vm558, %v498, 0
      %v587 = vsel %vm558, %v499, 0
      %v590 = vsel %vm558, %v500, 0
      %v593 = vsel %vm558, %v501, 0
      %v596 = vsel %vm558, %v502, 0
      %v599 = vsel %vm558, %v503, 0
      %v602 = vsel %vm558, %v504, 0
      %v605 = vsel %vm558, %v505, 0
      %v608 = vsel %vm558, %v506, 0
      %v611 = vsel %vm558, %v507, 0
      %v614 = vsel %vm558, %v508, 0
      %v617 = vsel %vm558, %v509, 0
      %v620 = vsel %vm558, %v510, 0
      %v623 = vsel %vm558, %v511, 0
      %v626 = vsel %vm558, %v512, 0
      %v629 = vsel %vm558, %v513, 0
      %v632 = vsel %vm558, %v514, 0
      %v635 = vsel %vm558, %v515, 0
      %v638 = vsel %vm558, %v516, 0
      %v641 = vsel %vm558, %v517, 0
      %v644 = vsel %vm558, %v518, 0
      %v647 = vsel %vm558, %v519, 0
      %v650 = vsel %vm558, %v520, 0
      %v653 = vsel %vm558, %v521, 0
      %655 = vmatprep.subr.bf16.mxu0 0
      %656 = vmatpush1.bf16.msra.mxu0 %v546
      %657 = vmatprep.subr.bf16.mxu0 0
      %658 = vmatpush1.bf16.msra.mxu0 %v547
      %659 = vmatprep.subr.bf16.mxu0 0
      %660 = vmatpush1.bf16.msra.mxu0 %v548
      %661 = vmatprep.subr.bf16.mxu0 0
      %662 = vmatpush1.bf16.msra.mxu0 %v549
      %663 = vmatprep.subr.bf16.mxu0 0
      %664 = vmatpush1.bf16.msra.mxu0 %v550
      %665 = vmatprep.subr.bf16.mxu0 0
      %666 = vmatpush1.bf16.msra.mxu0 %v551
      %667 = vmatprep.subr.bf16.mxu0 0
      %668 = vmatpush1.bf16.msra.mxu0 0
      %669 = vmatprep.subr.bf16.mxu0 0
      %670 = vmatpush1.bf16.msra.mxu0 0
      %671 = vmatprep.subr.bf16.mxu0 0
      %672 = vmatpush1.bf16.msra.mxu0 0
      %673 = vmatprep.subr.bf16.mxu0 0
      %674 = vmatpush1.bf16.msra.mxu0 0
      %675 = vmatprep.subr.bf16.mxu0 0
      %676 = vmatpush1.bf16.msra.mxu0 0
      %677 = vmatprep.subr.bf16.mxu0 0
      %678 = vmatpush1.bf16.msra.mxu0 0
      %679 = vmatprep.subr.bf16.mxu0 0
      %680 = vmatpush1.bf16.msra.mxu0 0
      %681 = vmatprep.subr.bf16.mxu0 0
      %682 = vmatpush1.bf16.msra.mxu0 0
      %683 = vmatprep.subr.bf16.mxu0 0
      %684 = vmatpush1.bf16.msra.mxu0 0
      %685 = vmatprep.subr.bf16.mxu0 0
      %686 = vmatpush1.bf16.msra.mxu0 0
      %687 = vmatprep.mubr.bf16.mxu0 0
      %688 = vmatmul.mubr.bf16.gmra.mrb[0].mxu0 %v560
      %v689 = vpop.f32.mrb[0].mxu0
      %v690 = vadd.f32 %v360, %v689
      %v691 = vpop.f32.mrb[0].mxu0
      %v692 = vpop.f32.mrb[0].mxu0
      %v693 = vadd.f32 %v360, %v692
      %v694 = vpop.f32.mrb[0].mxu0
      %695 = vmatprep.mubr.bf16.mxu0 0
      %696 = vmatmul.mubr.bf16.gmra.mrb[0].mxu0 %v563
      %v697 = vpop.f32.mrb[0].mxu0
      %v698 = vadd.f32 %v360, %v697
      %v699 = vpop.f32.mrb[0].mxu0
      %v700 = vpop.f32.mrb[0].mxu0
      %v701 = vadd.f32 %v360, %v700
      %v702 = vpop.f32.mrb[0].mxu0
      %703 = vmatprep.mubr.bf16.mxu0 0
      %704 = vmatmul.mubr.bf16.gmra.mrb[0].mxu0 %v566
      %v705 = vpop.f32.mrb[0].mxu0
      %v706 = vadd.f32 %v360, %v705
      %v707 = vpop.f32.mrb[0].mxu0
      %v708 = vpop.f32.mrb[0].mxu0
      %v709 = vadd.f32 %v360, %v708
      %v710 = vpop.f32.mrb[0].mxu0
      %711 = vmatprep.mubr.bf16.mxu0 0
      %712 = vmatmul.mubr.bf16.gmra.mrb[0].mxu0 %v569
      %v713 = vpop.f32.mrb[0].mxu0
      %v714 = vadd.f32 %v360, %v713
      %v715 = vpop.f32.mrb[0].mxu0
      %v716 = vpop.f32.mrb[0].mxu0
      %v717 = vadd.f32 %v360, %v716
      %v718 = vpop.f32.mrb[0].mxu0
      %719 = vmatprep.mubr.bf16.mxu0 0
      %720 = vmatmul.mubr.bf16.gmra.mrb[0].mxu0 %v572
      %v721 = vpop.f32.mrb[0].mxu0
      %v722 = vadd.f32 %v360, %v721
      %v723 = vpop.f32.mrb[0].mxu0
      %v724 = vpop.f32.mrb[0].mxu0
      %v725 = vadd.f32 %v360, %v724
      %v726 = vpop.f32.mrb[0].mxu0
      %727 = vmatprep.mubr.bf16.mxu0 0
      %728 = vmatmul.mubr.bf16.gmra.mrb[0].mxu0 %v575
      %v729 = vpop.f32.mrb[0].mxu0
      %v730 = vadd.f32 %v360, %v729
      %v731 = vpop.f32.mrb[0].mxu0
      %v732 = vpop.f32.mrb[0].mxu0
      %v733 = vadd.f32 %v360, %v732
      %v734 = vpop.f32.mrb[0].mxu0
      %735 = vmatprep.mubr.bf16.mxu0 0
      %736 = vmatmul.mubr.bf16.gmra.mrb[0].mxu0 %v578
      %v737 = vpop.f32.mrb[0].mxu0
      %v738 = vadd.f32 %v360, %v737
      %v739 = vpop.f32.mrb[0].mxu0
      %v740 = vpop.f32.mrb[0].mxu0
      %v741 = vadd.f32 %v360, %v740
      %v742 = vpop.f32.mrb[0].mxu0
      %743 = vmatprep.mubr.bf16.mxu0 0
      %744 = vmatmul.mubr.bf16.gmra.mrb[0].mxu0 %v581
      %v745 = vpop.f32.mrb[0].mxu0
      %v746 = vadd.f32 %v360, %v745
      %v747 = vpop.f32.mrb[0].mxu0
      %v748 = vpop.f32.mrb[0].mxu0
      %v749 = vadd.f32 %v360, %v748
      %v750 = vpop.f32.mrb[0].mxu0
      %751 = vmatprep.mubr.bf16.mxu0 0
      %752 = vmatmul.mubr.bf16.gmra.mrb[0].mxu0 %v584
      %v753 = vpop.f32.mrb[0].mxu0
      %v754 = vadd.f32 %v360, %v753
      %v755 = vpop.f32.mrb[0].mxu0
      %v756 = vpop.f32.mrb[0].mxu0
      %v757 = vadd.f32 %v360, %v756
      %v758 = vpop.f32.mrb[0].mxu0
      %759 = vmatprep.mubr.bf16.mxu0 0
      %760 = vmatmul.mubr.bf16.gmra.mrb[0].mxu0 %v587
      %v761 = vpop.f32.mrb[0].mxu0
      %v762 = vadd.f32 %v360, %v761
      %v763 = vpop.f32.mrb[0].mxu0
      %v764 = vpop.f32.mrb[0].mxu0
      %v765 = vadd.f32 %v360, %v764
      %v766 = vpop.f32.mrb[0].mxu0
      %767 = vmatprep.mubr.bf16.mxu0 0
      %768 = vmatmul.mubr.bf16.gmra.mrb[0].mxu0 %v590
      %v769 = vpop.f32.mrb[0].mxu0
      %v770 = vadd.f32 %v360, %v769
      %v771 = vpop.f32.mrb[0].mxu0
      %v772 = vpop.f32.mrb[0].mxu0
      %v773 = vadd.f32 %v360, %v772
      %v774 = vpop.f32.mrb[0].mxu0
      %775 = vmatprep.mubr.bf16.mxu0 0
      %776 = vmatmul.mubr.bf16.gmra.mrb[0].mxu0 %v593
      %v777 = vpop.f32.mrb[0].mxu0
      %v778 = vadd.f32 %v360, %v777
      %v779 = vpop.f32.mrb[0].mxu0
      %v780 = vpop.f32.mrb[0].mxu0
      %v781 = vadd.f32 %v360, %v780
      %v782 = vpop.f32.mrb[0].mxu0
      %783 = vmatprep.mubr.bf16.mxu0 0
      %784 = vmatmul.mubr.bf16.gmra.mrb[0].mxu0 %v596
      %v785 = vpop.f32.mrb[0].mxu0
      %v786 = vadd.f32 %v360, %v785
      %v787 = vpop.f32.mrb[0].mxu0
      %v788 = vpop.f32.mrb[0].mxu0
      %v789 = vadd.f32 %v360, %v788
      %v790 = vpop.f32.mrb[0].mxu0
      %791 = vmatprep.mubr.bf16.mxu0 0
      %792 = vmatmul.mubr.bf16.gmra.mrb[0].mxu0 %v599
      %v793 = vpop.f32.mrb[0].mxu0
      %v794 = vadd.f32 %v360, %v793
      %v795 = vpop.f32.mrb[0].mxu0
      %v796 = vpop.f32.mrb[0].mxu0
      %v797 = vadd.f32 %v360, %v796
      %v798 = vpop.f32.mrb[0].mxu0
      %799 = vmatprep.mubr.bf16.mxu0 0
      %800 = vmatmul.mubr.bf16.gmra.mrb[0].mxu0 %v602
      %v801 = vpop.f32.mrb[0].mxu0
      %v802 = vadd.f32 %v360, %v801
      %v803 = vpop.f32.mrb[0].mxu0
      %v804 = vpop.f32.mrb[0].mxu0
      %v805 = vadd.f32 %v360, %v804
      %v806 = vpop.f32.mrb[0].mxu0
      %807 = vmatprep.mubr.bf16.mxu0 0
      %808 = vmatmul.mubr.bf16.gmra.mrb[0].mxu0 %v605
      %v809 = vpop.f32.mrb[0].mxu0
      %v810 = vadd.f32 %v360, %v809
      %v811 = vpop.f32.mrb[0].mxu0
      %v812 = vpop.f32.mrb[0].mxu0
      %v813 = vadd.f32 %v360, %v812
      %v814 = vpop.f32.mrb[0].mxu0
      %815 = vmatprep.mubr.bf16.mxu0 0
      %816 = vmatmul.mubr.bf16.gmra.mrb[0].mxu0 %v608
      %v817 = vpop.f32.mrb[0].mxu0
      %v818 = vadd.f32 %v360, %v817
      %v819 = vpop.f32.mrb[0].mxu0
      %v820 = vpop.f32.mrb[0].mxu0
      %v821 = vadd.f32 %v360, %v820
      %v822 = vpop.f32.mrb[0].mxu0
      %823 = vmatprep.mubr.bf16.mxu0 0
      %824 = vmatmul.mubr.bf16.gmra.mrb[0].mxu0 %v611
      %v825 = vpop.f32.mrb[0].mxu0
      %v826 = vadd.f32 %v360, %v825
      %v827 = vpop.f32.mrb[0].mxu0
      %v828 = vpop.f32.mrb[0].mxu0
      %v829 = vadd.f32 %v360, %v828
      %v830 = vpop.f32.mrb[0].mxu0
      %831 = vmatprep.mubr.bf16.mxu0 0
      %832 = vmatmul.mubr.bf16.gmra.mrb[0].mxu0 %v614
      %v833 = vpop.f32.mrb[0].mxu0
      %v834 = vadd.f32 %v360, %v833
      %v835 = vpop.f32.mrb[0].mxu0
      %v836 = vpop.f32.mrb[0].mxu0
      %v837 = vadd.f32 %v360, %v836
      %v838 = vpop.f32.mrb[0].mxu0
      %839 = vmatprep.mubr.bf16.mxu0 0
      %840 = vmatmul.mubr.bf16.gmra.mrb[0].mxu0 %v617
      %v841 = vpop.f32.mrb[0].mxu0
      %v842 = vadd.f32 %v360, %v841
      %v843 = vpop.f32.mrb[0].mxu0
      %v844 = vpop.f32.mrb[0].mxu0
      %v845 = vadd.f32 %v360, %v844
      %v846 = vpop.f32.mrb[0].mxu0
      %847 = vmatprep.mubr.bf16.mxu0 0
      %848 = vmatmul.mubr.bf16.gmra.mrb[0].mxu0 %v620
      %v849 = vpop.f32.mrb[0].mxu0
      %v850 = vadd.f32 %v360, %v849
      %v851 = vpop.f32.mrb[0].mxu0
      %v852 = vpop.f32.mrb[0].mxu0
      %v853 = vadd.f32 %v360, %v852
      %v854 = vpop.f32.mrb[0].mxu0
      %855 = vmatprep.mubr.bf16.mxu0 0
      %856 = vmatmul.mubr.bf16.gmra.mrb[0].mxu0 %v623
      %v857 = vpop.f32.mrb[0].mxu0
      %v858 = vadd.f32 %v360, %v857
      %v859 = vpop.f32.mrb[0].mxu0
      %v860 = vpop.f32.mrb[0].mxu0
      %v861 = vadd.f32 %v360, %v860
      %v862 = vpop.f32.mrb[0].mxu0
      %863 = vmatprep.mubr.bf16.mxu0 0
      %864 = vmatmul.mubr.bf16.gmra.mrb[0].mxu0 %v626
      %v865 = vpop.f32.mrb[0].mxu0
      %v866 = vadd.f32 %v360, %v865
      %v867 = vpop.f32.mrb[0].mxu0
      %v868 = vpop.f32.mrb[0].mxu0
      %v869 = vadd.f32 %v360, %v868
      %v870 = vpop.f32.mrb[0].mxu0
      %871 = vmatprep.mubr.bf16.mxu0 0
      %872 = vmatmul.mubr.bf16.gmra.mrb[0].mxu0 %v629
      %v873 = vpop.f32.mrb[0].mxu0
      %v874 = vadd.f32 %v360, %v873
      %v875 = vpop.f32.mrb[0].mxu0
      %v876 = vpop.f32.mrb[0].mxu0
      %v877 = vadd.f32 %v360, %v876
      %v878 = vpop.f32.mrb[0].mxu0
      %879 = vmatprep.mubr.bf16.mxu0 0
      %880 = vmatmul.mubr.bf16.gmra.mrb[0].mxu0 %v632
      %v881 = vpop.f32.mrb[0].mxu0
      %v882 = vadd.f32 %v360, %v881
      %v883 = vpop.f32.mrb[0].mxu0
      %v884 = vpop.f32.mrb[0].mxu0
      %v885 = vadd.f32 %v360, %v884
      %v886 = vpop.f32.mrb[0].mxu0
      %887 = vmatprep.mubr.bf16.mxu0 0
      %888 = vmatmul.mubr.bf16.gmra.mrb[0].mxu0 %v635
      %v889 = vpop.f32.mrb[0].mxu0
      %v890 = vadd.f32 %v360, %v889
      %v891 = vpop.f32.mrb[0].mxu0
      %v892 = vpop.f32.mrb[0].mxu0
      %v893 = vadd.f32 %v360, %v892
      %v894 = vpop.f32.mrb[0].mxu0
      %895 = vmatprep.mubr.bf16.mxu0 0
      %896 = vmatmul.mubr.bf16.gmra.mrb[0].mxu0 %v638
      %v897 = vpop.f32.mrb[0].mxu0
      %v898 = vadd.f32 %v360, %v897
      %v899 = vpop.f32.mrb[0].mxu0
      %v900 = vpop.f32.mrb[0].mxu0
      %v901 = vadd.f32 %v360, %v900
      %v902 = vpop.f32.mrb[0].mxu0
      %903 = vmatprep.mubr.bf16.mxu0 0
      %904 = vmatmul.mubr.bf16.gmra.mrb[0].mxu0 %v641
      %v905 = vpop.f32.mrb[0].mxu0
      %v906 = vadd.f32 %v360, %v905
      %v907 = vpop.f32.mrb[0].mxu0
      %v908 = vpop.f32.mrb[0].mxu0
      %v909 = vadd.f32 %v360, %v908
      %v910 = vpop.f32.mrb[0].mxu0
      %911 = vmatprep.mubr.bf16.mxu0 0
      %912 = vmatmul.mubr.bf16.gmra.mrb[0].mxu0 %v644
      %v913 = vpop.f32.mrb[0].mxu0
      %v914 = vadd.f32 %v360, %v913
      %v915 = vpop.f32.mrb[0].mxu0
      %v916 = vpop.f32.mrb[0].mxu0
      %v917 = vadd.f32 %v360, %v916
      %v918 = vpop.f32.mrb[0].mxu0
      %919 = vmatprep.mubr.bf16.mxu0 0
      %920 = vmatmul.mubr.bf16.gmra.mrb[0].mxu0 %v647
      %v921 = vpop.f32.mrb[0].mxu0
      %v922 = vadd.f32 %v360, %v921
      %v923 = vpop.f32.mrb[0].mxu0
      %v924 = vpop.f32.mrb[0].mxu0
      %v925 = vadd.f32 %v360, %v924
      %v926 = vpop.f32.mrb[0].mxu0
      %927 = vmatprep.mubr.bf16.mxu0 0
      %928 = vmatmul.mubr.bf16.gmra.mrb[0].mxu0 %v650
      %v929 = vpop.f32.mrb[0].mxu0
      %v930 = vadd.f32 %v360, %v929
      %v931 = vpop.f32.mrb[0].mxu0
      %v932 = vpop.f32.mrb[0].mxu0
      %v933 = vadd.f32 %v360, %v932
      %v934 = vpop.f32.mrb[0].mxu0
      %935 = vmatprep.mubr.bf16.mxu0 0
      %936 = vmatmul.mubr.bf16.gmra.mrb[0].mxu0 %v653
      %v937 = vpop.f32.mrb[0].mxu0
      %v938 = vadd.f32 %v360, %v937
      %v939 = vpop.f32.mrb[0].mxu0
      %v940 = vpop.f32.mrb[0].mxu0
      %v941 = vadd.f32 %v360, %v940
      %v942 = vpop.f32.mrb[0].mxu0
      %943 = vdwg.mxu0
      %v944 = vmax.f32 %v690, 0.0
      %v945 = vmax.f32 %v693, 0.0
      %v946 = vmax.f32 %v698, 0.0
      %v947 = vmax.f32 %v701, 0.0
      %v948 = vmax.f32 %v706, 0.0
      %v949 = vmax.f32 %v709, 0.0
      %v950 = vmax.f32 %v714, 0.0
      %v951 = vmax.f32 %v717, 0.0
      %v952 = vmax.f32 %v722, 0.0
      %v953 = vmax.f32 %v725, 0.0
      %v954 = vmax.f32 %v730, 0.0
      %v955 = vmax.f32 %v733, 0.0
      %v956 = vmax.f32 %v738, 0.0
      %v957 = vmax.f32 %v741, 0.0
      %v958 = vmax.f32 %v746, 0.0
      %v959 = vmax.f32 %v749, 0.0
      %v960 = vmax.f32 %v754, 0.0
      %v961 = vmax.f32 %v757, 0.0
      %v962 = vmax.f32 %v762, 0.0
      %v963 = vmax.f32 %v765, 0.0
      %v964 = vmax.f32 %v770, 0.0
      %v965 = vmax.f32 %v773, 0.0
      %v966 = vmax.f32 %v778, 0.0
      %v967 = vmax.f32 %v781, 0.0
      %v968 = vmax.f32 %v786, 0.0
      %v969 = vmax.f32 %v789, 0.0
      %v970 = vmax.f32 %v794, 0.0
      %v971 = vmax.f32 %v797, 0.0
      %v972 = vmax.f32 %v802, 0.0
      %v973 = vmax.f32 %v805, 0.0
      %v974 = vmax.f32 %v810, 0.0
      %v975 = vmax.f32 %v813, 0.0
      %v976 = vmax.f32 %v818, 0.0
      %v977 = vmax.f32 %v821, 0.0
      %v978 = vmax.f32 %v826, 0.0
      %v979 = vmax.f32 %v829, 0.0
      %v980 = vmax.f32 %v834, 0.0
      %v981 = vmax.f32 %v837, 0.0
      %v982 = vmax.f32 %v842, 0.0
      %v983 = vmax.f32 %v845, 0.0
      %v984 = vmax.f32 %v850, 0.0
      %v985 = vmax.f32 %v853, 0.0
      %v986 = vmax.f32 %v858, 0.0
      %v987 = vmax.f32 %v861, 0.0
      %v988 = vmax.f32 %v866, 0.0
      %v989 = vmax.f32 %v869, 0.0
      %v990 = vmax.f32 %v874, 0.0
      %v991 = vmax.f32 %v877, 0.0
      %v992 = vmax.f32 %v882, 0.0
      %v993 = vmax.f32 %v885, 0.0
      %v994 = vmax.f32 %v890, 0.0
      %v995 = vmax.f32 %v893, 0.0
      %v996 = vmax.f32 %v898, 0.0
      %v997 = vmax.f32 %v901, 0.0
      %v998 = vmax.f32 %v906, 0.0
      %v999 = vmax.f32 %v909, 0.0
      %v1000 = vmax.f32 %v914, 0.0
      %v1001 = vmax.f32 %v917, 0.0
      %v1002 = vmax.f32 %v922, 0.0
      %v1003 = vmax.f32 %v925, 0.0
      %v1004 = vmax.f32 %v930, 0.0
      %v1005 = vmax.f32 %v933, 0.0
      %v1006 = vmax.f32 %v938, 0.0
      %v1007 = vmax.f32 %v941, 0.0
      %v1008 = vld [vmem:[%s258] sm:$0xff]
      %v1009 = vld [vmem:[%s258 + $0x8] sm:$0xff]
      %v1010 = vld [vmem:[%s258 + $0x10] sm:$0xff]
      %v1011 = vld [vmem:[%s258 + $0x18] sm:$0xff]
      %v1016 = vcombine.high %v1008, %v1008
      %v1018 = vunpack.c.l.s4 1966171168
      %v1019 = vunpack.c.0.s8 %v1018
      %v1020 = vlaneseq
      %v1021 = vshrl.u32 %v1020, 7
      %v1022 = vsub.s32 %v1019, %v1021
      %v1023 = vrot.slane %v1008, %v1022
      %v1025 = vunpack.c.l.s4 1966171168
      %v1026 = vunpack.c.0.s8 %v1025
      %v1027 = vlaneseq
      %v1028 = vshrl.u32 %v1027, 7
      %v1029 = vsub.s32 %v1026, %v1028
      %v1030 = vrot.slane %v1016, %v1029
      %v1031 = vcombine.high %v1023, %v1023
      %v1032 = vcombine.high %v1030, %v1030
      %v1034 = vunpack.c.l.s4 1966171168
      %v1035 = vunpack.c.0.s8 %v1034
      %v1036 = vlaneseq
      %v1037 = vshrl.u32 %v1036, 7
      %v1038 = vsub.s32 %v1035, %v1037
      %v1039 = vrot.slane %v1023, %v1038
      %v1041 = vunpack.c.l.s4 1966171168
      %v1042 = vunpack.c.0.s8 %v1041
      %v1043 = vlaneseq
      %v1044 = vshrl.u32 %v1043, 7
      %v1045 = vsub.s32 %v1042, %v1044
      %v1046 = vrot.slane %v1030, %v1045
      %v1048 = vunpack.c.l.s4 1966171168
      %v1049 = vunpack.c.0.s8 %v1048
      %v1050 = vlaneseq
      %v1051 = vshrl.u32 %v1050, 7
      %v1052 = vsub.s32 %v1049, %v1051
      %v1053 = vrot.slane %v1031, %v1052
      %v1055 = vunpack.c.l.s4 1966171168
      %v1056 = vunpack.c.0.s8 %v1055
      %v1057 = vlaneseq
      %v1058 = vshrl.u32 %v1057, 7
      %v1059 = vsub.s32 %v1056, %v1058
      %v1060 = vrot.slane %v1032, %v1059
      %v1061 = vcombine.high %v1039, %v1039
      %v1062 = vcombine.high %v1046, %v1046
      %v1063 = vcombine.high %v1053, %v1053
      %v1064 = vcombine.high %v1060, %v1060
      %v1065 = vcombine.high %v1009, %v1009
      %v1067 = vunpack.c.l.s4 1966171168
      %v1068 = vunpack.c.0.s8 %v1067
      %v1069 = vlaneseq
      %v1070 = vshrl.u32 %v1069, 7
      %v1071 = vsub.s32 %v1068, %v1070
      %v1072 = vrot.slane %v1009, %v1071
      %v1074 = vunpack.c.l.s4 1966171168
      %v1075 = vunpack.c.0.s8 %v1074
      %v1076 = vlaneseq
      %v1077 = vshrl.u32 %v1076, 7
      %v1078 = vsub.s32 %v1075, %v1077
      %v1079 = vrot.slane %v1065, %v1078
      %v1080 = vcombine.high %v1072, %v1072
      %v1081 = vcombine.high %v1079, %v1079
      %v1083 = vunpack.c.l.s4 1966171168
      %v1084 = vunpack.c.0.s8 %v1083
      %v1085 = vlaneseq
      %v1086 = vshrl.u32 %v1085, 7
      %v1087 = vsub.s32 %v1084, %v1086
      %v1088 = vrot.slane %v1072, %v1087
      %v1090 = vunpack.c.l.s4 1966171168
      %v1091 = vunpack.c.0.s8 %v1090
      %v1092 = vlaneseq
      %v1093 = vshrl.u32 %v1092, 7
      %v1094 = vsub.s32 %v1091, %v1093
      %v1095 = vrot.slane %v1079, %v1094
      %v1097 = vunpack.c.l.s4 1966171168
      %v1098 = vunpack.c.0.s8 %v1097
      %v1099 = vlaneseq
      %v1100 = vshrl.u32 %v1099, 7
      %v1101 = vsub.s32 %v1098, %v1100
      %v1102 = vrot.slane %v1080, %v1101
      %v1104 = vunpack.c.l.s4 1966171168
      %v1105 = vunpack.c.0.s8 %v1104
      %v1106 = vlaneseq
      %v1107 = vshrl.u32 %v1106, 7
      %v1108 = vsub.s32 %v1105, %v1107
      %v1109 = vrot.slane %v1081, %v1108
      %v1110 = vcombine.high %v1088, %v1088
      %v1111 = vcombine.high %v1095, %v1095
      %v1112 = vcombine.high %v1102, %v1102
      %v1113 = vcombine.high %v1109, %v1109
      %v1114 = vcombine.high %v1010, %v1010
      %v1116 = vunpack.c.l.s4 1966171168
      %v1117 = vunpack.c.0.s8 %v1116
      %v1118 = vlaneseq
      %v1119 = vshrl.u32 %v1118, 7
      %v1120 = vsub.s32 %v1117, %v1119
      %v1121 = vrot.slane %v1010, %v1120
      %v1123 = vunpack.c.l.s4 1966171168
      %v1124 = vunpack.c.0.s8 %v1123
      %v1125 = vlaneseq
      %v1126 = vshrl.u32 %v1125, 7
      %v1127 = vsub.s32 %v1124, %v1126
      %v1128 = vrot.slane %v1114, %v1127
      %v1129 = vcombine.high %v1121, %v1121
      %v1130 = vcombine.high %v1128, %v1128
      %v1132 = vunpack.c.l.s4 1966171168
      %v1133 = vunpack.c.0.s8 %v1132
      %v1134 = vlaneseq
      %v1135 = vshrl.u32 %v1134, 7
      %v1136 = vsub.s32 %v1133, %v1135
      %v1137 = vrot.slane %v1121, %v1136
      %v1139 = vunpack.c.l.s4 1966171168
      %v1140 = vunpack.c.0.s8 %v1139
      %v1141 = vlaneseq
      %v1142 = vshrl.u32 %v1141, 7
      %v1143 = vsub.s32 %v1140, %v1142
      %v1144 = vrot.slane %v1128, %v1143
      %v1146 = vunpack.c.l.s4 1966171168
      %v1147 = vunpack.c.0.s8 %v1146
      %v1148 = vlaneseq
      %v1149 = vshrl.u32 %v1148, 7
      %v1150 = vsub.s32 %v1147, %v1149
      %v1151 = vrot.slane %v1129, %v1150
      %v1153 = vunpack.c.l.s4 1966171168
      %v1154 = vunpack.c.0.s8 %v1153
      %v1155 = vlaneseq
      %v1156 = vshrl.u32 %v1155, 7
      %v1157 = vsub.s32 %v1154, %v1156
      %v1158 = vrot.slane %v1130, %v1157
      %v1159 = vcombine.high %v1137, %v1137
      %v1160 = vcombine.high %v1144, %v1144
      %v1161 = vcombine.high %v1151, %v1151
      %v1162 = vcombine.high %v1158, %v1158
      %v1163 = vcombine.high %v1011, %v1011
      %v1165 = vunpack.c.l.s4 1966171168
      %v1166 = vunpack.c.0.s8 %v1165
      %v1167 = vlaneseq
      %v1168 = vshrl.u32 %v1167, 7
      %v1169 = vsub.s32 %v1166, %v1168
      %v1170 = vrot.slane %v1011, %v1169
      %v1172 = vunpack.c.l.s4 1966171168
      %v1173 = vunpack.c.0.s8 %v1172
      %v1174 = vlaneseq
      %v1175 = vshrl.u32 %v1174, 7
      %v1176 = vsub.s32 %v1173, %v1175
      %v1177 = vrot.slane %v1163, %v1176
      %v1178 = vcombine.high %v1170, %v1170
      %v1179 = vcombine.high %v1177, %v1177
      %v1181 = vunpack.c.l.s4 1966171168
      %v1182 = vunpack.c.0.s8 %v1181
      %v1183 = vlaneseq
      %v1184 = vshrl.u32 %v1183, 7
      %v1185 = vsub.s32 %v1182, %v1184
      %v1186 = vrot.slane %v1170, %v1185
      %v1188 = vunpack.c.l.s4 1966171168
      %v1189 = vunpack.c.0.s8 %v1188
      %v1190 = vlaneseq
      %v1191 = vshrl.u32 %v1190, 7
      %v1192 = vsub.s32 %v1189, %v1191
      %v1193 = vrot.slane %v1177, %v1192
      %v1195 = vunpack.c.l.s4 1966171168
      %v1196 = vunpack.c.0.s8 %v1195
      %v1197 = vlaneseq
      %v1198 = vshrl.u32 %v1197, 7
      %v1199 = vsub.s32 %v1196, %v1198
      %v1200 = vrot.slane %v1178, %v1199
      %v1202 = vunpack.c.l.s4 1966171168
      %v1203 = vunpack.c.0.s8 %v1202
      %v1204 = vlaneseq
      %v1205 = vshrl.u32 %v1204, 7
      %v1206 = vsub.s32 %v1203, %v1205
      %v1207 = vrot.slane %v1179, %v1206
      %v1208 = vcombine.high %v1186, %v1186
      %v1209 = vcombine.high %v1193, %v1193
      %v1210 = vcombine.high %v1200, %v1200
      %v1211 = vcombine.high %v1207, %v1207
      %v1212 = vlaneseq
      %v1213 = vshrl.u32 %v1212, 7
      %v1214 = vsub.s32 0, %v1213
      %v1215 = vrot.slane %v1039, %v1214
      %v1216 = vlaneseq
      %v1217 = vshrl.u32 %v1216, 7
      %v1218 = vsub.s32 0, %v1217
      %v1219 = vrot.slane %v1053, %v1218
      %v1220 = vlaneseq
      %v1221 = vshrl.u32 %v1220, 7
      %v1222 = vsub.s32 0, %v1221
      %v1223 = vrot.slane %v1061, %v1222
      %v1224 = vlaneseq
      %v1225 = vshrl.u32 %v1224, 7
      %v1226 = vsub.s32 0, %v1225
      %v1227 = vrot.slane %v1063, %v1226
      %v1228 = vlaneseq
      %v1229 = vshrl.u32 %v1228, 7
      %v1230 = vsub.s32 0, %v1229
      %v1231 = vrot.slane %v1046, %v1230
      %v1232 = vlaneseq
      %v1233 = vshrl.u32 %v1232, 7
      %v1234 = vsub.s32 0, %v1233
      %v1235 = vrot.slane %v1060, %v1234
      %v1236 = vlaneseq
      %v1237 = vshrl.u32 %v1236, 7
      %v1238 = vsub.s32 0, %v1237
      %v1239 = vrot.slane %v1062, %v1238
      %v1240 = vlaneseq
      %v1241 = vshrl.u32 %v1240, 7
      %v1242 = vsub.s32 0, %v1241
      %v1243 = vrot.slane %v1064, %v1242
      %v1244 = vlaneseq
      %v1245 = vshrl.u32 %v1244, 7
      %v1246 = vsub.s32 0, %v1245
      %v1247 = vrot.slane %v1088, %v1246
      %v1248 = vlaneseq
      %v1249 = vshrl.u32 %v1248, 7
      %v1250 = vsub.s32 0, %v1249
      %v1251 = vrot.slane %v1102, %v1250
      %v1252 = vlaneseq
      %v1253 = vshrl.u32 %v1252, 7
      %v1254 = vsub.s32 0, %v1253
      %v1255 = vrot.slane %v1110, %v1254
      %v1256 = vlaneseq
      %v1257 = vshrl.u32 %v1256, 7
      %v1258 = vsub.s32 0, %v1257
      %v1259 = vrot.slane %v1112, %v1258
      %v1260 = vlaneseq
      %v1261 = vshrl.u32 %v1260, 7
      %v1262 = vsub.s32 0, %v1261
      %v1263 = vrot.slane %v1095, %v1262
      %v1264 = vlaneseq
      %v1265 = vshrl.u32 %v1264, 7
      %v1266 = vsub.s32 0, %v1265
      %v1267 = vrot.slane %v1109, %v1266
      %v1268 = vlaneseq
      %v1269 = vshrl.u32 %v1268, 7
      %v1270 = vsub.s32 0, %v1269
      %v1271 = vrot.slane %v1111, %v1270
      %v1272 = vlaneseq
      %v1273 = vshrl.u32 %v1272, 7
      %v1274 = vsub.s32 0, %v1273
      %v1275 = vrot.slane %v1113, %v1274
      %v1276 = vlaneseq
      %v1277 = vshrl.u32 %v1276, 7
      %v1278 = vsub.s32 0, %v1277
      %v1279 = vrot.slane %v1137, %v1278
      %v1280 = vlaneseq
      %v1281 = vshrl.u32 %v1280, 7
      %v1282 = vsub.s32 0, %v1281
      %v1283 = vrot.slane %v1151, %v1282
      %v1284 = vlaneseq
      %v1285 = vshrl.u32 %v1284, 7
      %v1286 = vsub.s32 0, %v1285
      %v1287 = vrot.slane %v1159, %v1286
      %v1288 = vlaneseq
      %v1289 = vshrl.u32 %v1288, 7
      %v1290 = vsub.s32 0, %v1289
      %v1291 = vrot.slane %v1161, %v1290
      %v1292 = vlaneseq
      %v1293 = vshrl.u32 %v1292, 7
      %v1294 = vsub.s32 0, %v1293
      %v1295 = vrot.slane %v1144, %v1294
      %v1296 = vlaneseq
      %v1297 = vshrl.u32 %v1296, 7
      %v1298 = vsub.s32 0, %v1297
      %v1299 = vrot.slane %v1158, %v1298
      %v1300 = vlaneseq
      %v1301 = vshrl.u32 %v1300, 7
      %v1302 = vsub.s32 0, %v1301
      %v1303 = vrot.slane %v1160, %v1302
      %v1304 = vlaneseq
      %v1305 = vshrl.u32 %v1304, 7
      %v1306 = vsub.s32 0, %v1305
      %v1307 = vrot.slane %v1162, %v1306
      %v1308 = vlaneseq
      %v1309 = vshrl.u32 %v1308, 7
      %v1310 = vsub.s32 0, %v1309
      %v1311 = vrot.slane %v1186, %v1310
      %v1312 = vlaneseq
      %v1313 = vshrl.u32 %v1312, 7
      %v1314 = vsub.s32 0, %v1313
      %v1315 = vrot.slane %v1200, %v1314
      %v1316 = vlaneseq
      %v1317 = vshrl.u32 %v1316, 7
      %v1318 = vsub.s32 0, %v1317
      %v1319 = vrot.slane %v1208, %v1318
      %v1320 = vlaneseq
      %v1321 = vshrl.u32 %v1320, 7
      %v1322 = vsub.s32 0, %v1321
      %v1323 = vrot.slane %v1210, %v1322
      %v1324 = vlaneseq
      %v1325 = vshrl.u32 %v1324, 7
      %v1326 = vsub.s32 0, %v1325
      %v1327 = vrot.slane %v1193, %v1326
      %v1328 = vlaneseq
      %v1329 = vshrl.u32 %v1328, 7
      %v1330 = vsub.s32 0, %v1329
      %v1331 = vrot.slane %v1207, %v1330
      %v1332 = vlaneseq
      %v1333 = vshrl.u32 %v1332, 7
      %v1334 = vsub.s32 0, %v1333
      %v1335 = vrot.slane %v1209, %v1334
      %v1336 = vlaneseq
      %v1337 = vshrl.u32 %v1336, 7
      %v1338 = vsub.s32 0, %v1337
      %v1339 = vrot.slane %v1211, %v1338
      %v1372 = vmul.f32 %v944, %v1215
      %v1373 = vmul.f32 %v945, %v1215
      %v1374 = vmul.f32 %v946, %v1219
      %v1375 = vmul.f32 %v947, %v1219
      %v1376 = vmul.f32 %v948, %v1223
      %v1377 = vmul.f32 %v949, %v1223
      %v1378 = vmul.f32 %v950, %v1227
      %v1379 = vmul.f32 %v951, %v1227
      %v1380 = vmul.f32 %v952, %v1231
      %v1381 = vmul.f32 %v953, %v1231
      %v1382 = vmul.f32 %v954, %v1235
      %v1383 = vmul.f32 %v955, %v1235
      %v1384 = vmul.f32 %v956, %v1239
      %v1385 = vmul.f32 %v957, %v1239
      %v1386 = vmul.f32 %v958, %v1243
      %v1387 = vmul.f32 %v959, %v1243
      %v1388 = vmul.f32 %v960, %v1247
      %v1389 = vmul.f32 %v961, %v1247
      %v1390 = vmul.f32 %v962, %v1251
      %v1391 = vmul.f32 %v963, %v1251
      %v1392 = vmul.f32 %v964, %v1255
      %v1393 = vmul.f32 %v965, %v1255
      %v1394 = vmul.f32 %v966, %v1259
      %v1395 = vmul.f32 %v967, %v1259
      %v1396 = vmul.f32 %v968, %v1263
      %v1397 = vmul.f32 %v969, %v1263
      %v1398 = vmul.f32 %v970, %v1267
      %v1399 = vmul.f32 %v971, %v1267
      %v1400 = vmul.f32 %v972, %v1271
      %v1401 = vmul.f32 %v973, %v1271
      %v1402 = vmul.f32 %v974, %v1275
      %v1403 = vmul.f32 %v975, %v1275
      %v1404 = vmul.f32 %v976, %v1279
      %v1405 = vmul.f32 %v977, %v1279
      %v1406 = vmul.f32 %v978, %v1283
      %v1407 = vmul.f32 %v979, %v1283
      %v1408 = vmul.f32 %v980, %v1287
      %v1409 = vmul.f32 %v981, %v1287
      %v1410 = vmul.f32 %v982, %v1291
      %v1411 = vmul.f32 %v983, %v1291
      %v1412 = vmul.f32 %v984, %v1295
      %v1413 = vmul.f32 %v985, %v1295
      %v1414 = vmul.f32 %v986, %v1299
      %v1415 = vmul.f32 %v987, %v1299
      %v1416 = vmul.f32 %v988, %v1303
      %v1417 = vmul.f32 %v989, %v1303
      %v1418 = vmul.f32 %v990, %v1307
      %v1419 = vmul.f32 %v991, %v1307
      %v1420 = vmul.f32 %v992, %v1311
      %v1421 = vmul.f32 %v993, %v1311
      %v1422 = vmul.f32 %v994, %v1315
      %v1423 = vmul.f32 %v995, %v1315
      %v1424 = vmul.f32 %v996, %v1319
      %v1425 = vmul.f32 %v997, %v1319
      %v1426 = vmul.f32 %v998, %v1323
      %v1427 = vmul.f32 %v999, %v1323
      %v1428 = vmul.f32 %v1000, %v1327
      %v1429 = vmul.f32 %v1001, %v1327
      %v1430 = vmul.f32 %v1002, %v1331
      %v1431 = vmul.f32 %v1003, %v1331
      %v1432 = vmul.f32 %v1004, %v1335
      %v1433 = vmul.f32 %v1005, %v1335
      %v1434 = vmul.f32 %v1006, %v1339
      %v1435 = vmul.f32 %v1007, %v1339
      %vm1436 = vcmask 261120
      %v1437 = vsel %vm1436, %v1372, 0.0
      %1438 = vadd.xlane.f32.xlu0 %v1437
      %v1439 = vpop.xlane.xlu0 %1438
      %v1440 = vsel %vm1436, %v1373, 0.0
      %1441 = vadd.xlane.f32.xlu0 %v1440
      %v1442 = vpop.xlane.xlu0 %1441
      %v1443 = vsel %vm1436, %v1374, 0.0
      %1444 = vadd.xlane.f32.xlu0 %v1443
      %v1445 = vpop.xlane.xlu0 %1444
      %v1446 = vsel %vm1436, %v1375, 0.0
      %1447 = vadd.xlane.f32.xlu0 %v1446
      %v1448 = vpop.xlane.xlu0 %1447
      %v1449 = vsel %vm1436, %v1376, 0.0
      %1450 = vadd.xlane.f32.xlu0 %v1449
      %v1451 = vpop.xlane.xlu0 %1450
      %v1452 = vsel %vm1436, %v1377, 0.0
      %1453 = vadd.xlane.f32.xlu0 %v1452
      %v1454 = vpop.xlane.xlu0 %1453
      %v1455 = vsel %vm1436, %v1378, 0.0
      %1456 = vadd.xlane.f32.xlu0 %v1455
      %v1457 = vpop.xlane.xlu0 %1456
      %v1458 = vsel %vm1436, %v1379, 0.0
      %1459 = vadd.xlane.f32.xlu0 %v1458
      %v1460 = vpop.xlane.xlu0 %1459
      %v1461 = vsel %vm1436, %v1380, 0.0
      %1462 = vadd.xlane.f32.xlu0 %v1461
      %v1463 = vpop.xlane.xlu0 %1462
      %v1464 = vsel %vm1436, %v1381, 0.0
      %1465 = vadd.xlane.f32.xlu0 %v1464
      %v1466 = vpop.xlane.xlu0 %1465
      %v1467 = vsel %vm1436, %v1382, 0.0
      %1468 = vadd.xlane.f32.xlu0 %v1467
      %v1469 = vpop.xlane.xlu0 %1468
      %v1470 = vsel %vm1436, %v1383, 0.0
      %1471 = vadd.xlane.f32.xlu0 %v1470
      %v1472 = vpop.xlane.xlu0 %1471
      %v1473 = vsel %vm1436, %v1384, 0.0
      %1474 = vadd.xlane.f32.xlu0 %v1473
      %v1475 = vpop.xlane.xlu0 %1474
      %v1476 = vsel %vm1436, %v1385, 0.0
      %1477 = vadd.xlane.f32.xlu0 %v1476
      %v1478 = vpop.xlane.xlu0 %1477
      %v1479 = vsel %vm1436, %v1386, 0.0
      %1480 = vadd.xlane.f32.xlu0 %v1479
      %v1481 = vpop.xlane.xlu0 %1480
      %v1482 = vsel %vm1436, %v1387, 0.0
      %1483 = vadd.xlane.f32.xlu0 %v1482
      %v1484 = vpop.xlane.xlu0 %1483
      %v1485 = vsel %vm1436, %v1388, 0.0
      %1486 = vadd.xlane.f32.xlu0 %v1485
      %v1487 = vpop.xlane.xlu0 %1486
      %v1488 = vsel %vm1436, %v1389, 0.0
      %1489 = vadd.xlane.f32.xlu0 %v1488
      %v1490 = vpop.xlane.xlu0 %1489
      %v1491 = vsel %vm1436, %v1390, 0.0
      %1492 = vadd.xlane.f32.xlu0 %v1491
      %v1493 = vpop.xlane.xlu0 %1492
      %v1494 = vsel %vm1436, %v1391, 0.0
      %1495 = vadd.xlane.f32.xlu0 %v1494
      %v1496 = vpop.xlane.xlu0 %1495
      %v1497 = vsel %vm1436, %v1392, 0.0
      %1498 = vadd.xlane.f32.xlu0 %v1497
      %v1499 = vpop.xlane.xlu0 %1498
      %v1500 = vsel %vm1436, %v1393, 0.0
      %1501 = vadd.xlane.f32.xlu0 %v1500
      %v1502 = vpop.xlane.xlu0 %1501
      %v1503 = vsel %vm1436, %v1394, 0.0
      %1504 = vadd.xlane.f32.xlu0 %v1503
      %v1505 = vpop.xlane.xlu0 %1504
      %v1506 = vsel %vm1436, %v1395, 0.0
      %1507 = vadd.xlane.f32.xlu0 %v1506
      %v1508 = vpop.xlane.xlu0 %1507
      %v1509 = vsel %vm1436, %v1396, 0.0
      %1510 = vadd.xlane.f32.xlu0 %v1509
      %v1511 = vpop.xlane.xlu0 %1510
      %v1512 = vsel %vm1436, %v1397, 0.0
      %1513 = vadd.xlane.f32.xlu0 %v1512
      %v1514 = vpop.xlane.xlu0 %1513
      %v1515 = vsel %vm1436, %v1398, 0.0
      %1516 = vadd.xlane.f32.xlu0 %v1515
      %v1517 = vpop.xlane.xlu0 %1516
      %v1518 = vsel %vm1436, %v1399, 0.0
      %1519 = vadd.xlane.f32.xlu0 %v1518
      %v1520 = vpop.xlane.xlu0 %1519
      %v1521 = vsel %vm1436, %v1400, 0.0
      %1522 = vadd.xlane.f32.xlu0 %v1521
      %v1523 = vpop.xlane.xlu0 %1522
      %v1524 = vsel %vm1436, %v1401, 0.0
      %1525 = vadd.xlane.f32.xlu0 %v1524
      %v1526 = vpop.xlane.xlu0 %1525
      %v1527 = vsel %vm1436, %v1402, 0.0
      %1528 = vadd.xlane.f32.xlu0 %v1527
      %v1529 = vpop.xlane.xlu0 %1528
      %v1530 = vsel %vm1436, %v1403, 0.0
      %1531 = vadd.xlane.f32.xlu0 %v1530
      %v1532 = vpop.xlane.xlu0 %1531
      %v1533 = vsel %vm1436, %v1404, 0.0
      %1534 = vadd.xlane.f32.xlu0 %v1533
      %v1535 = vpop.xlane.xlu0 %1534
      %v1536 = vsel %vm1436, %v1405, 0.0
      %1537 = vadd.xlane.f32.xlu0 %v1536
      %v1538 = vpop.xlane.xlu0 %1537
      %v1539 = vsel %vm1436, %v1406, 0.0
      %1540 = vadd.xlane.f32.xlu0 %v1539
      %v1541 = vpop.xlane.xlu0 %1540
      %v1542 = vsel %vm1436, %v1407, 0.0
      %1543 = vadd.xlane.f32.xlu0 %v1542
      %v1544 = vpop.xlane.xlu0 %1543
      %v1545 = vsel %vm1436, %v1408, 0.0
      %1546 = vadd.xlane.f32.xlu0 %v1545
      %v1547 = vpop.xlane.xlu0 %1546
      %v1548 = vsel %vm1436, %v1409, 0.0
      %1549 = vadd.xlane.f32.xlu0 %v1548
      %v1550 = vpop.xlane.xlu0 %1549
      %v1551 = vsel %vm1436, %v1410, 0.0
      %1552 = vadd.xlane.f32.xlu0 %v1551
      %v1553 = vpop.xlane.xlu0 %1552
      %v1554 = vsel %vm1436, %v1411, 0.0
      %1555 = vadd.xlane.f32.xlu0 %v1554
      %v1556 = vpop.xlane.xlu0 %1555
      %v1557 = vsel %vm1436, %v1412, 0.0
      %1558 = vadd.xlane.f32.xlu0 %v1557
      %v1559 = vpop.xlane.xlu0 %1558
      %v1560 = vsel %vm1436, %v1413, 0.0
      %1561 = vadd.xlane.f32.xlu0 %v1560
      %v1562 = vpop.xlane.xlu0 %1561
      %v1563 = vsel %vm1436, %v1414, 0.0
      %1564 = vadd.xlane.f32.xlu0 %v1563
      %v1565 = vpop.xlane.xlu0 %1564
      %v1566 = vsel %vm1436, %v1415, 0.0
      %1567 = vadd.xlane.f32.xlu0 %v1566
      %v1568 = vpop.xlane.xlu0 %1567
      %v1569 = vsel %vm1436, %v1416, 0.0
      %1570 = vadd.xlane.f32.xlu0 %v1569
      %v1571 = vpop.xlane.xlu0 %1570
      %v1572 = vsel %vm1436, %v1417, 0.0
      %1573 = vadd.xlane.f32.xlu0 %v1572
      %v1574 = vpop.xlane.xlu0 %1573
      %v1575 = vsel %vm1436, %v1418, 0.0
      %1576 = vadd.xlane.f32.xlu0 %v1575
      %v1577 = vpop.xlane.xlu0 %1576
      %v1578 = vsel %vm1436, %v1419, 0.0
      %1579 = vadd.xlane.f32.xlu0 %v1578
      %v1580 = vpop.xlane.xlu0 %1579
      %v1581 = vsel %vm1436, %v1420, 0.0
      %1582 = vadd.xlane.f32.xlu0 %v1581
      %v1583 = vpop.xlane.xlu0 %1582
      %v1584 = vsel %vm1436, %v1421, 0.0
      %1585 = vadd.xlane.f32.xlu0 %v1584
      %v1586 = vpop.xlane.xlu0 %1585
      %v1587 = vsel %vm1436, %v1422, 0.0
      %1588 = vadd.xlane.f32.xlu0 %v1587
      %v1589 = vpop.xlane.xlu0 %1588
      %v1590 = vsel %vm1436, %v1423, 0.0
      %1591 = vadd.xlane.f32.xlu0 %v1590
      %v1592 = vpop.xlane.xlu0 %1591
      %v1593 = vsel %vm1436, %v1424, 0.0
      %1594 = vadd.xlane.f32.xlu0 %v1593
      %v1595 = vpop.xlane.xlu0 %1594
      %v1596 = vsel %vm1436, %v1425, 0.0
      %1597 = vadd.xlane.f32.xlu0 %v1596
      %v1598 = vpop.xlane.xlu0 %1597
      %v1599 = vsel %vm1436, %v1426, 0.0
      %1600 = vadd.xlane.f32.xlu0 %v1599
      %v1601 = vpop.xlane.xlu0 %1600
      %v1602 = vsel %vm1436, %v1427, 0.0
      %1603 = vadd.xlane.f32.xlu0 %v1602
      %v1604 = vpop.xlane.xlu0 %1603
      %v1605 = vsel %vm1436, %v1428, 0.0
      %1606 = vadd.xlane.f32.xlu0 %v1605
      %v1607 = vpop.xlane.xlu0 %1606
      %v1608 = vsel %vm1436, %v1429, 0.0
      %1609 = vadd.xlane.f32.xlu0 %v1608
      %v1610 = vpop.xlane.xlu0 %1609
      %v1611 = vsel %vm1436, %v1430, 0.0
      %1612 = vadd.xlane.f32.xlu0 %v1611
      %v1613 = vpop.xlane.xlu0 %1612
      %v1614 = vsel %vm1436, %v1431, 0.0
      %1615 = vadd.xlane.f32.xlu0 %v1614
      %v1616 = vpop.xlane.xlu0 %1615
      %v1617 = vsel %vm1436, %v1432, 0.0
      %1618 = vadd.xlane.f32.xlu0 %v1617
      %v1619 = vpop.xlane.xlu0 %1618
      %v1620 = vsel %vm1436, %v1433, 0.0
      %1621 = vadd.xlane.f32.xlu0 %v1620
      %v1622 = vpop.xlane.xlu0 %1621
      %v1623 = vsel %vm1436, %v1434, 0.0
      %1624 = vadd.xlane.f32.xlu0 %v1623
      %v1625 = vpop.xlane.xlu0 %1624
      %v1626 = vsel %vm1436, %v1435, 0.0
      %1627 = vadd.xlane.f32.xlu0 %v1626
      %v1628 = vpop.xlane.xlu0 %1627
      %v1629 = vmax.f32 %v1439, %v1442
      %v1630 = vrot.slane %v1629, 4
      %v1631 = vmax.f32 %v1629, %v1630
      %v1632 = vrot.slane %v1631, 2
      %v1633 = vmax.f32 %v1631, %v1632
      %v1634 = vrot.slane %v1633, 1
      %v1635 = vmax.f32 %v1633, %v1634
      %v1636 = vmax.f32 %v1445, %v1448
      %v1637 = vrot.slane %v1636, 4
      %v1638 = vmax.f32 %v1636, %v1637
      %v1639 = vrot.slane %v1638, 2
      %v1640 = vmax.f32 %v1638, %v1639
      %v1641 = vrot.slane %v1640, 1
      %v1642 = vmax.f32 %v1640, %v1641
      %v1643 = vmax.f32 %v1451, %v1454
      %v1644 = vrot.slane %v1643, 4
      %v1645 = vmax.f32 %v1643, %v1644
      %v1646 = vrot.slane %v1645, 2
      %v1647 = vmax.f32 %v1645, %v1646
      %v1648 = vrot.slane %v1647, 1
      %v1649 = vmax.f32 %v1647, %v1648
      %v1650 = vmax.f32 %v1457, %v1460
      %v1651 = vrot.slane %v1650, 4
      %v1652 = vmax.f32 %v1650, %v1651
      %v1653 = vrot.slane %v1652, 2
      %v1654 = vmax.f32 %v1652, %v1653
      %v1655 = vrot.slane %v1654, 1
      %v1656 = vmax.f32 %v1654, %v1655
      %v1657 = vmax.f32 %v1463, %v1466
      %v1658 = vrot.slane %v1657, 4
      %v1659 = vmax.f32 %v1657, %v1658
      %v1660 = vrot.slane %v1659, 2
      %v1661 = vmax.f32 %v1659, %v1660
      %v1662 = vrot.slane %v1661, 1
      %v1663 = vmax.f32 %v1661, %v1662
      %v1664 = vmax.f32 %v1469, %v1472
      %v1665 = vrot.slane %v1664, 4
      %v1666 = vmax.f32 %v1664, %v1665
      %v1667 = vrot.slane %v1666, 2
      %v1668 = vmax.f32 %v1666, %v1667
      %v1669 = vrot.slane %v1668, 1
      %v1670 = vmax.f32 %v1668, %v1669
      %v1671 = vmax.f32 %v1475, %v1478
      %v1672 = vrot.slane %v1671, 4
      %v1673 = vmax.f32 %v1671, %v1672
      %v1674 = vrot.slane %v1673, 2
      %v1675 = vmax.f32 %v1673, %v1674
      %v1676 = vrot.slane %v1675, 1
      %v1677 = vmax.f32 %v1675, %v1676
      %v1678 = vmax.f32 %v1481, %v1484
      %v1679 = vrot.slane %v1678, 4
      %v1680 = vmax.f32 %v1678, %v1679
      %v1681 = vrot.slane %v1680, 2
      %v1682 = vmax.f32 %v1680, %v1681
      %v1683 = vrot.slane %v1682, 1
      %v1684 = vmax.f32 %v1682, %v1683
      %v1685 = vmax.f32 %v1487, %v1490
      %v1686 = vrot.slane %v1685, 4
      %v1687 = vmax.f32 %v1685, %v1686
      %v1688 = vrot.slane %v1687, 2
      %v1689 = vmax.f32 %v1687, %v1688
      %v1690 = vrot.slane %v1689, 1
      %v1691 = vmax.f32 %v1689, %v1690
      %v1692 = vmax.f32 %v1493, %v1496
      %v1693 = vrot.slane %v1692, 4
      %v1694 = vmax.f32 %v1692, %v1693
      %v1695 = vrot.slane %v1694, 2
      %v1696 = vmax.f32 %v1694, %v1695
      %v1697 = vrot.slane %v1696, 1
      %v1698 = vmax.f32 %v1696, %v1697
      %v1699 = vmax.f32 %v1499, %v1502
      %v1700 = vrot.slane %v1699, 4
      %v1701 = vmax.f32 %v1699, %v1700
      %v1702 = vrot.slane %v1701, 2
      %v1703 = vmax.f32 %v1701, %v1702
      %v1704 = vrot.slane %v1703, 1
      %v1705 = vmax.f32 %v1703, %v1704
      %v1706 = vmax.f32 %v1505, %v1508
      %v1707 = vrot.slane %v1706, 4
      %v1708 = vmax.f32 %v1706, %v1707
      %v1709 = vrot.slane %v1708, 2
      %v1710 = vmax.f32 %v1708, %v1709
      %v1711 = vrot.slane %v1710, 1
      %v1712 = vmax.f32 %v1710, %v1711
      %v1713 = vmax.f32 %v1511, %v1514
      %v1714 = vrot.slane %v1713, 4
      %v1715 = vmax.f32 %v1713, %v1714
      %v1716 = vrot.slane %v1715, 2
      %v1717 = vmax.f32 %v1715, %v1716
      %v1718 = vrot.slane %v1717, 1
      %v1719 = vmax.f32 %v1717, %v1718
      %v1720 = vmax.f32 %v1517, %v1520
      %v1721 = vrot.slane %v1720, 4
      %v1722 = vmax.f32 %v1720, %v1721
      %v1723 = vrot.slane %v1722, 2
      %v1724 = vmax.f32 %v1722, %v1723
      %v1725 = vrot.slane %v1724, 1
      %v1726 = vmax.f32 %v1724, %v1725
      %v1727 = vmax.f32 %v1523, %v1526
      %v1728 = vrot.slane %v1727, 4
      %v1729 = vmax.f32 %v1727, %v1728
      %v1730 = vrot.slane %v1729, 2
      %v1731 = vmax.f32 %v1729, %v1730
      %v1732 = vrot.slane %v1731, 1
      %v1733 = vmax.f32 %v1731, %v1732
      %v1734 = vmax.f32 %v1529, %v1532
      %v1735 = vrot.slane %v1734, 4
      %v1736 = vmax.f32 %v1734, %v1735
      %v1737 = vrot.slane %v1736, 2
      %v1738 = vmax.f32 %v1736, %v1737
      %v1739 = vrot.slane %v1738, 1
      %v1740 = vmax.f32 %v1738, %v1739
      %v1741 = vmax.f32 %v1535, %v1538
      %v1742 = vrot.slane %v1741, 4
      %v1743 = vmax.f32 %v1741, %v1742
      %v1744 = vrot.slane %v1743, 2
      %v1745 = vmax.f32 %v1743, %v1744
      %v1746 = vrot.slane %v1745, 1
      %v1747 = vmax.f32 %v1745, %v1746
      %v1748 = vmax.f32 %v1541, %v1544
      %v1749 = vrot.slane %v1748, 4
      %v1750 = vmax.f32 %v1748, %v1749
      %v1751 = vrot.slane %v1750, 2
      %v1752 = vmax.f32 %v1750, %v1751
      %v1753 = vrot.slane %v1752, 1
      %v1754 = vmax.f32 %v1752, %v1753
      %v1755 = vmax.f32 %v1547, %v1550
      %v1756 = vrot.slane %v1755, 4
      %v1757 = vmax.f32 %v1755, %v1756
      %v1758 = vrot.slane %v1757, 2
      %v1759 = vmax.f32 %v1757, %v1758
      %v1760 = vrot.slane %v1759, 1
      %v1761 = vmax.f32 %v1759, %v1760
      %v1762 = vmax.f32 %v1553, %v1556
      %v1763 = vrot.slane %v1762, 4
      %v1764 = vmax.f32 %v1762, %v1763
      %v1765 = vrot.slane %v1764, 2
      %v1766 = vmax.f32 %v1764, %v1765
      %v1767 = vrot.slane %v1766, 1
      %v1768 = vmax.f32 %v1766, %v1767
      %v1769 = vmax.f32 %v1559, %v1562
      %v1770 = vrot.slane %v1769, 4
      %v1771 = vmax.f32 %v1769, %v1770
      %v1772 = vrot.slane %v1771, 2
      %v1773 = vmax.f32 %v1771, %v1772
      %v1774 = vrot.slane %v1773, 1
      %v1775 = vmax.f32 %v1773, %v1774
      %v1776 = vmax.f32 %v1565, %v1568
      %v1777 = vrot.slane %v1776, 4
      %v1778 = vmax.f32 %v1776, %v1777
      %v1779 = vrot.slane %v1778, 2
      %v1780 = vmax.f32 %v1778, %v1779
      %v1781 = vrot.slane %v1780, 1
      %v1782 = vmax.f32 %v1780, %v1781
      %v1783 = vmax.f32 %v1571, %v1574
      %v1784 = vrot.slane %v1783, 4
      %v1785 = vmax.f32 %v1783, %v1784
      %v1786 = vrot.slane %v1785, 2
      %v1787 = vmax.f32 %v1785, %v1786
      %v1788 = vrot.slane %v1787, 1
      %v1789 = vmax.f32 %v1787, %v1788
      %v1790 = vmax.f32 %v1577, %v1580
      %v1791 = vrot.slane %v1790, 4
      %v1792 = vmax.f32 %v1790, %v1791
      %v1793 = vrot.slane %v1792, 2
      %v1794 = vmax.f32 %v1792, %v1793
      %v1795 = vrot.slane %v1794, 1
      %v1796 = vmax.f32 %v1794, %v1795
      %v1797 = vmax.f32 %v1583, %v1586
      %v1798 = vrot.slane %v1797, 4
      %v1799 = vmax.f32 %v1797, %v1798
      %v1800 = vrot.slane %v1799, 2
      %v1801 = vmax.f32 %v1799, %v1800
      %v1802 = vrot.slane %v1801, 1
      %v1803 = vmax.f32 %v1801, %v1802
      %v1804 = vmax.f32 %v1589, %v1592
      %v1805 = vrot.slane %v1804, 4
      %v1806 = vmax.f32 %v1804, %v1805
      %v1807 = vrot.slane %v1806, 2
      %v1808 = vmax.f32 %v1806, %v1807
      %v1809 = vrot.slane %v1808, 1
      %v1810 = vmax.f32 %v1808, %v1809
      %v1811 = vmax.f32 %v1595, %v1598
      %v1812 = vrot.slane %v1811, 4
      %v1813 = vmax.f32 %v1811, %v1812
      %v1814 = vrot.slane %v1813, 2
      %v1815 = vmax.f32 %v1813, %v1814
      %v1816 = vrot.slane %v1815, 1
      %v1817 = vmax.f32 %v1815, %v1816
      %v1818 = vmax.f32 %v1601, %v1604
      %v1819 = vrot.slane %v1818, 4
      %v1820 = vmax.f32 %v1818, %v1819
      %v1821 = vrot.slane %v1820, 2
      %v1822 = vmax.f32 %v1820, %v1821
      %v1823 = vrot.slane %v1822, 1
      %v1824 = vmax.f32 %v1822, %v1823
      %v1825 = vmax.f32 %v1607, %v1610
      %v1826 = vrot.slane %v1825, 4
      %v1827 = vmax.f32 %v1825, %v1826
      %v1828 = vrot.slane %v1827, 2
      %v1829 = vmax.f32 %v1827, %v1828
      %v1830 = vrot.slane %v1829, 1
      %v1831 = vmax.f32 %v1829, %v1830
      %v1832 = vmax.f32 %v1613, %v1616
      %v1833 = vrot.slane %v1832, 4
      %v1834 = vmax.f32 %v1832, %v1833
      %v1835 = vrot.slane %v1834, 2
      %v1836 = vmax.f32 %v1834, %v1835
      %v1837 = vrot.slane %v1836, 1
      %v1838 = vmax.f32 %v1836, %v1837
      %v1839 = vmax.f32 %v1619, %v1622
      %v1840 = vrot.slane %v1839, 4
      %v1841 = vmax.f32 %v1839, %v1840
      %v1842 = vrot.slane %v1841, 2
      %v1843 = vmax.f32 %v1841, %v1842
      %v1844 = vrot.slane %v1843, 1
      %v1845 = vmax.f32 %v1843, %v1844
      %v1846 = vmax.f32 %v1625, %v1628
      %v1847 = vrot.slane %v1846, 4
      %v1848 = vmax.f32 %v1846, %v1847
      %v1849 = vrot.slane %v1848, 2
      %v1850 = vmax.f32 %v1848, %v1849
      %v1851 = vrot.slane %v1850, 1
      %v1852 = vmax.f32 %v1850, %v1851
      %v1853 = vsub.f32 %v1439, %v1635
      %v1854 = vsub.f32 %v1442, %v1635
      %v1855 = vsub.f32 %v1445, %v1642
      %v1856 = vsub.f32 %v1448, %v1642
      %v1857 = vsub.f32 %v1451, %v1649
      %v1858 = vsub.f32 %v1454, %v1649
      %v1859 = vsub.f32 %v1457, %v1656
      %v1860 = vsub.f32 %v1460, %v1656
      %v1861 = vsub.f32 %v1463, %v1663
      %v1862 = vsub.f32 %v1466, %v1663
      %v1863 = vsub.f32 %v1469, %v1670
      %v1864 = vsub.f32 %v1472, %v1670
      %v1865 = vsub.f32 %v1475, %v1677
      %v1866 = vsub.f32 %v1478, %v1677
      %v1867 = vsub.f32 %v1481, %v1684
      %v1868 = vsub.f32 %v1484, %v1684
      %v1869 = vsub.f32 %v1487, %v1691
      %v1870 = vsub.f32 %v1490, %v1691
      %v1871 = vsub.f32 %v1493, %v1698
      %v1872 = vsub.f32 %v1496, %v1698
      %v1873 = vsub.f32 %v1499, %v1705
      %v1874 = vsub.f32 %v1502, %v1705
      %v1875 = vsub.f32 %v1505, %v1712
      %v1876 = vsub.f32 %v1508, %v1712
      %v1877 = vsub.f32 %v1511, %v1719
      %v1878 = vsub.f32 %v1514, %v1719
      %v1879 = vsub.f32 %v1517, %v1726
      %v1880 = vsub.f32 %v1520, %v1726
      %v1881 = vsub.f32 %v1523, %v1733
      %v1882 = vsub.f32 %v1526, %v1733
      %v1883 = vsub.f32 %v1529, %v1740
      %v1884 = vsub.f32 %v1532, %v1740
      %v1885 = vsub.f32 %v1535, %v1747
      %v1886 = vsub.f32 %v1538, %v1747
      %v1887 = vsub.f32 %v1541, %v1754
      %v1888 = vsub.f32 %v1544, %v1754
      %v1889 = vsub.f32 %v1547, %v1761
      %v1890 = vsub.f32 %v1550, %v1761
      %v1891 = vsub.f32 %v1553, %v1768
      %v1892 = vsub.f32 %v1556, %v1768
      %v1893 = vsub.f32 %v1559, %v1775
      %v1894 = vsub.f32 %v1562, %v1775
      %v1895 = vsub.f32 %v1565, %v1782
      %v1896 = vsub.f32 %v1568, %v1782
      %v1897 = vsub.f32 %v1571, %v1789
      %v1898 = vsub.f32 %v1574, %v1789
      %v1899 = vsub.f32 %v1577, %v1796
      %v1900 = vsub.f32 %v1580, %v1796
      %v1901 = vsub.f32 %v1583, %v1803
      %v1902 = vsub.f32 %v1586, %v1803
      %v1903 = vsub.f32 %v1589, %v1810
      %v1904 = vsub.f32 %v1592, %v1810
      %v1905 = vsub.f32 %v1595, %v1817
      %v1906 = vsub.f32 %v1598, %v1817
      %v1907 = vsub.f32 %v1601, %v1824
      %v1908 = vsub.f32 %v1604, %v1824
      %v1909 = vsub.f32 %v1607, %v1831
      %v1910 = vsub.f32 %v1610, %v1831
      %v1911 = vsub.f32 %v1613, %v1838
      %v1912 = vsub.f32 %v1616, %v1838
      %v1913 = vsub.f32 %v1619, %v1845
      %v1914 = vsub.f32 %v1622, %v1845
      %v1915 = vsub.f32 %v1625, %v1852
      %v1916 = vsub.f32 %v1628, %v1852
      %v1917 = vmul.f32 %v1853, 1.442695
      %v1918 = vpow.pop %v1917
      %v1919 = vmul.f32 %v1854, 1.442695
      %v1920 = vpow.pop %v1919
      %v1921 = vmul.f32 %v1855, 1.442695
      %v1922 = vpow.pop %v1921
      %v1923 = vmul.f32 %v1856, 1.442695
      %v1924 = vpow.pop %v1923
      %v1925 = vmul.f32 %v1857, 1.442695
      %v1926 = vpow.pop %v1925
      %v1927 = vmul.f32 %v1858, 1.442695
      %v1928 = vpow.pop %v1927
      %v1929 = vmul.f32 %v1859, 1.442695
      %v1930 = vpow.pop %v1929
      %v1931 = vmul.f32 %v1860, 1.442695
      %v1932 = vpow.pop %v1931
      %v1933 = vmul.f32 %v1861, 1.442695
      %v1934 = vpow.pop %v1933
      %v1935 = vmul.f32 %v1862, 1.442695
      %v1936 = vpow.pop %v1935
      %v1937 = vmul.f32 %v1863, 1.442695
      %v1938 = vpow.pop %v1937
      %v1939 = vmul.f32 %v1864, 1.442695
      %v1940 = vpow.pop %v1939
      %v1941 = vmul.f32 %v1865, 1.442695
      %v1942 = vpow.pop %v1941
      %v1943 = vmul.f32 %v1866, 1.442695
      %v1944 = vpow.pop %v1943
      %v1945 = vmul.f32 %v1867, 1.442695
      %v1946 = vpow.pop %v1945
      %v1947 = vmul.f32 %v1868, 1.442695
      %v1948 = vpow.pop %v1947
      %v1949 = vmul.f32 %v1869, 1.442695
      %v1950 = vpow.pop %v1949
      %v1951 = vmul.f32 %v1870, 1.442695
      %v1952 = vpow.pop %v1951
      %v1953 = vmul.f32 %v1871, 1.442695
      %v1954 = vpow.pop %v1953
      %v1955 = vmul.f32 %v1872, 1.442695
      %v1956 = vpow.pop %v1955
      %v1957 = vmul.f32 %v1873, 1.442695
      %v1958 = vpow.pop %v1957
      %v1959 = vmul.f32 %v1874, 1.442695
      %v1960 = vpow.pop %v1959
      %v1961 = vmul.f32 %v1875, 1.442695
      %v1962 = vpow.pop %v1961
      %v1963 = vmul.f32 %v1876, 1.442695
      %v1964 = vpow.pop %v1963
      %v1965 = vmul.f32 %v1877, 1.442695
      %v1966 = vpow.pop %v1965
      %v1967 = vmul.f32 %v1878, 1.442695
      %v1968 = vpow.pop %v1967
      %v1969 = vmul.f32 %v1879, 1.442695
      %v1970 = vpow.pop %v1969
      %v1971 = vmul.f32 %v1880, 1.442695
      %v1972 = vpow.pop %v1971
      %v1973 = vmul.f32 %v1881, 1.442695
      %v1974 = vpow.pop %v1973
      %v1975 = vmul.f32 %v1882, 1.442695
      %v1976 = vpow.pop %v1975
      %v1977 = vmul.f32 %v1883, 1.442695
      %v1978 = vpow.pop %v1977
      %v1979 = vmul.f32 %v1884, 1.442695
      %v1980 = vpow.pop %v1979
      %v1981 = vmul.f32 %v1885, 1.442695
      %v1982 = vpow.pop %v1981
      %v1983 = vmul.f32 %v1886, 1.442695
      %v1984 = vpow.pop %v1983
      %v1985 = vmul.f32 %v1887, 1.442695
      %v1986 = vpow.pop %v1985
      %v1987 = vmul.f32 %v1888, 1.442695
      %v1988 = vpow.pop %v1987
      %v1989 = vmul.f32 %v1889, 1.442695
      %v1990 = vpow.pop %v1989
      %v1991 = vmul.f32 %v1890, 1.442695
      %v1992 = vpow.pop %v1991
      %v1993 = vmul.f32 %v1891, 1.442695
      %v1994 = vpow.pop %v1993
      %v1995 = vmul.f32 %v1892, 1.442695
      %v1996 = vpow.pop %v1995
      %v1997 = vmul.f32 %v1893, 1.442695
      %v1998 = vpow.pop %v1997
      %v1999 = vmul.f32 %v1894, 1.442695
      %v2000 = vpow.pop %v1999
      %v2001 = vmul.f32 %v1895, 1.442695
      %v2002 = vpow.pop %v2001
      %v2003 = vmul.f32 %v1896, 1.442695
      %v2004 = vpow.pop %v2003
      %v2005 = vmul.f32 %v1897, 1.442695
      %v2006 = vpow.pop %v2005
      %v2007 = vmul.f32 %v1898, 1.442695
      %v2008 = vpow.pop %v2007
      %v2009 = vmul.f32 %v1899, 1.442695
      %v2010 = vpow.pop %v2009
      %v2011 = vmul.f32 %v1900, 1.442695
      %v2012 = vpow.pop %v2011
      %v2013 = vmul.f32 %v1901, 1.442695
      %v2014 = vpow.pop %v2013
      %v2015 = vmul.f32 %v1902, 1.442695
      %v2016 = vpow.pop %v2015
      %v2017 = vmul.f32 %v1903, 1.442695
      %v2018 = vpow.pop %v2017
      %v2019 = vmul.f32 %v1904, 1.442695
      %v2020 = vpow.pop %v2019
      %v2021 = vmul.f32 %v1905, 1.442695
      %v2022 = vpow.pop %v2021
      %v2023 = vmul.f32 %v1906, 1.442695
      %v2024 = vpow.pop %v2023
      %v2025 = vmul.f32 %v1907, 1.442695
      %v2026 = vpow.pop %v2025
      %v2027 = vmul.f32 %v1908, 1.442695
      %v2028 = vpow.pop %v2027
      %v2029 = vmul.f32 %v1909, 1.442695
      %v2030 = vpow.pop %v2029
      %v2031 = vmul.f32 %v1910, 1.442695
      %v2032 = vpow.pop %v2031
      %v2033 = vmul.f32 %v1911, 1.442695
      %v2034 = vpow.pop %v2033
      %v2035 = vmul.f32 %v1912, 1.442695
      %v2036 = vpow.pop %v2035
      %v2037 = vmul.f32 %v1913, 1.442695
      %v2038 = vpow.pop %v2037
      %v2039 = vmul.f32 %v1914, 1.442695
      %v2040 = vpow.pop %v2039
      %v2041 = vmul.f32 %v1915, 1.442695
      %v2042 = vpow.pop %v2041
      %v2043 = vmul.f32 %v1916, 1.442695
      %v2044 = vpow.pop %v2043
      %v2045 = vadd.f32 %v1918, %v1920
      %v2046 = vrot.slane %v2045, 4
      %v2047 = vadd.f32 %v2045, %v2046
      %v2048 = vrot.slane %v2047, 2
      %v2049 = vadd.f32 %v2047, %v2048
      %v2050 = vrot.slane %v2049, 1
      %v2051 = vadd.f32 %v2049, %v2050
      %v2052 = vadd.f32 %v1922, %v1924
      %v2053 = vrot.slane %v2052, 4
      %v2054 = vadd.f32 %v2052, %v2053
      %v2055 = vrot.slane %v2054, 2
      %v2056 = vadd.f32 %v2054, %v2055
      %v2057 = vrot.slane %v2056, 1
      %v2058 = vadd.f32 %v2056, %v2057
      %v2059 = vadd.f32 %v1926, %v1928
      %v2060 = vrot.slane %v2059, 4
      %v2061 = vadd.f32 %v2059, %v2060
      %v2062 = vrot.slane %v2061, 2
      %v2063 = vadd.f32 %v2061, %v2062
      %v2064 = vrot.slane %v2063, 1
      %v2065 = vadd.f32 %v2063, %v2064
      %v2066 = vadd.f32 %v1930, %v1932
      %v2067 = vrot.slane %v2066, 4
      %v2068 = vadd.f32 %v2066, %v2067
      %v2069 = vrot.slane %v2068, 2
      %v2070 = vadd.f32 %v2068, %v2069
      %v2071 = vrot.slane %v2070, 1
      %v2072 = vadd.f32 %v2070, %v2071
      %v2073 = vadd.f32 %v1934, %v1936
      %v2074 = vrot.slane %v2073, 4
      %v2075 = vadd.f32 %v2073, %v2074
      %v2076 = vrot.slane %v2075, 2
      %v2077 = vadd.f32 %v2075, %v2076
      %v2078 = vrot.slane %v2077, 1
      %v2079 = vadd.f32 %v2077, %v2078
      %v2080 = vadd.f32 %v1938, %v1940
      %v2081 = vrot.slane %v2080, 4
      %v2082 = vadd.f32 %v2080, %v2081
      %v2083 = vrot.slane %v2082, 2
      %v2084 = vadd.f32 %v2082, %v2083
      %v2085 = vrot.slane %v2084, 1
      %v2086 = vadd.f32 %v2084, %v2085
      %v2087 = vadd.f32 %v1942, %v1944
      %v2088 = vrot.slane %v2087, 4
      %v2089 = vadd.f32 %v2087, %v2088
      %v2090 = vrot.slane %v2089, 2
      %v2091 = vadd.f32 %v2089, %v2090
      %v2092 = vrot.slane %v2091, 1
      %v2093 = vadd.f32 %v2091, %v2092
      %v2094 = vadd.f32 %v1946, %v1948
      %v2095 = vrot.slane %v2094, 4
      %v2096 = vadd.f32 %v2094, %v2095
      %v2097 = vrot.slane %v2096, 2
      %v2098 = vadd.f32 %v2096, %v2097
      %v2099 = vrot.slane %v2098, 1
      %v2100 = vadd.f32 %v2098, %v2099
      %v2101 = vadd.f32 %v1950, %v1952
      %v2102 = vrot.slane %v2101, 4
      %v2103 = vadd.f32 %v2101, %v2102
      %v2104 = vrot.slane %v2103, 2
      %v2105 = vadd.f32 %v2103, %v2104
      %v2106 = vrot.slane %v2105, 1
      %v2107 = vadd.f32 %v2105, %v2106
      %v2108 = vadd.f32 %v1954, %v1956
      %v2109 = vrot.slane %v2108, 4
      %v2110 = vadd.f32 %v2108, %v2109
      %v2111 = vrot.slane %v2110, 2
      %v2112 = vadd.f32 %v2110, %v2111
      %v2113 = vrot.slane %v2112, 1
      %v2114 = vadd.f32 %v2112, %v2113
      %v2115 = vadd.f32 %v1958, %v1960
      %v2116 = vrot.slane %v2115, 4
      %v2117 = vadd.f32 %v2115, %v2116
      %v2118 = vrot.slane %v2117, 2
      %v2119 = vadd.f32 %v2117, %v2118
      %v2120 = vrot.slane %v2119, 1
      %v2121 = vadd.f32 %v2119, %v2120
      %v2122 = vadd.f32 %v1962, %v1964
      %v2123 = vrot.slane %v2122, 4
      %v2124 = vadd.f32 %v2122, %v2123
      %v2125 = vrot.slane %v2124, 2
      %v2126 = vadd.f32 %v2124, %v2125
      %v2127 = vrot.slane %v2126, 1
      %v2128 = vadd.f32 %v2126, %v2127
      %v2129 = vadd.f32 %v1966, %v1968
      %v2130 = vrot.slane %v2129, 4
      %v2131 = vadd.f32 %v2129, %v2130
      %v2132 = vrot.slane %v2131, 2
      %v2133 = vadd.f32 %v2131, %v2132
      %v2134 = vrot.slane %v2133, 1
      %v2135 = vadd.f32 %v2133, %v2134
      %v2136 = vadd.f32 %v1970, %v1972
      %v2137 = vrot.slane %v2136, 4
      %v2138 = vadd.f32 %v2136, %v2137
      %v2139 = vrot.slane %v2138, 2
      %v2140 = vadd.f32 %v2138, %v2139
      %v2141 = vrot.slane %v2140, 1
      %v2142 = vadd.f32 %v2140, %v2141
      %v2143 = vadd.f32 %v1974, %v1976
      %v2144 = vrot.slane %v2143, 4
      %v2145 = vadd.f32 %v2143, %v2144
      %v2146 = vrot.slane %v2145, 2
      %v2147 = vadd.f32 %v2145, %v2146
      %v2148 = vrot.slane %v2147, 1
      %v2149 = vadd.f32 %v2147, %v2148
      %v2150 = vadd.f32 %v1978, %v1980
      %v2151 = vrot.slane %v2150, 4
      %v2152 = vadd.f32 %v2150, %v2151
      %v2153 = vrot.slane %v2152, 2
      %v2154 = vadd.f32 %v2152, %v2153
      %v2155 = vrot.slane %v2154, 1
      %v2156 = vadd.f32 %v2154, %v2155
      %v2157 = vadd.f32 %v1982, %v1984
      %v2158 = vrot.slane %v2157, 4
      %v2159 = vadd.f32 %v2157, %v2158
      %v2160 = vrot.slane %v2159, 2
      %v2161 = vadd.f32 %v2159, %v2160
      %v2162 = vrot.slane %v2161, 1
      %v2163 = vadd.f32 %v2161, %v2162
      %v2164 = vadd.f32 %v1986, %v1988
      %v2165 = vrot.slane %v2164, 4
      %v2166 = vadd.f32 %v2164, %v2165
      %v2167 = vrot.slane %v2166, 2
      %v2168 = vadd.f32 %v2166, %v2167
      %v2169 = vrot.slane %v2168, 1
      %v2170 = vadd.f32 %v2168, %v2169
      %v2171 = vadd.f32 %v1990, %v1992
      %v2172 = vrot.slane %v2171, 4
      %v2173 = vadd.f32 %v2171, %v2172
      %v2174 = vrot.slane %v2173, 2
      %v2175 = vadd.f32 %v2173, %v2174
      %v2176 = vrot.slane %v2175, 1
      %v2177 = vadd.f32 %v2175, %v2176
      %v2178 = vadd.f32 %v1994, %v1996
      %v2179 = vrot.slane %v2178, 4
      %v2180 = vadd.f32 %v2178, %v2179
      %v2181 = vrot.slane %v2180, 2
      %v2182 = vadd.f32 %v2180, %v2181
      %v2183 = vrot.slane %v2182, 1
      %v2184 = vadd.f32 %v2182, %v2183
      %v2185 = vadd.f32 %v1998, %v2000
      %v2186 = vrot.slane %v2185, 4
      %v2187 = vadd.f32 %v2185, %v2186
      %v2188 = vrot.slane %v2187, 2
      %v2189 = vadd.f32 %v2187, %v2188
      %v2190 = vrot.slane %v2189, 1
      %v2191 = vadd.f32 %v2189, %v2190
      %v2192 = vadd.f32 %v2002, %v2004
      %v2193 = vrot.slane %v2192, 4
      %v2194 = vadd.f32 %v2192, %v2193
      %v2195 = vrot.slane %v2194, 2
      %v2196 = vadd.f32 %v2194, %v2195
      %v2197 = vrot.slane %v2196, 1
      %v2198 = vadd.f32 %v2196, %v2197
      %v2199 = vadd.f32 %v2006, %v2008
      %v2200 = vrot.slane %v2199, 4
      %v2201 = vadd.f32 %v2199, %v2200
      %v2202 = vrot.slane %v2201, 2
      %v2203 = vadd.f32 %v2201, %v2202
      %v2204 = vrot.slane %v2203, 1
      %v2205 = vadd.f32 %v2203, %v2204
      %v2206 = vadd.f32 %v2010, %v2012
      %v2207 = vrot.slane %v2206, 4
      %v2208 = vadd.f32 %v2206, %v2207
      %v2209 = vrot.slane %v2208, 2
      %v2210 = vadd.f32 %v2208, %v2209
      %v2211 = vrot.slane %v2210, 1
      %v2212 = vadd.f32 %v2210, %v2211
      %v2213 = vadd.f32 %v2014, %v2016
      %v2214 = vrot.slane %v2213, 4
      %v2215 = vadd.f32 %v2213, %v2214
      %v2216 = vrot.slane %v2215, 2
      %v2217 = vadd.f32 %v2215, %v2216
      %v2218 = vrot.slane %v2217, 1
      %v2219 = vadd.f32 %v2217, %v2218
      %v2220 = vadd.f32 %v2018, %v2020
      %v2221 = vrot.slane %v2220, 4
      %v2222 = vadd.f32 %v2220, %v2221
      %v2223 = vrot.slane %v2222, 2
      %v2224 = vadd.f32 %v2222, %v2223
      %v2225 = vrot.slane %v2224, 1
      %v2226 = vadd.f32 %v2224, %v2225
      %v2227 = vadd.f32 %v2022, %v2024
      %v2228 = vrot.slane %v2227, 4
      %v2229 = vadd.f32 %v2227, %v2228
      %v2230 = vrot.slane %v2229, 2
      %v2231 = vadd.f32 %v2229, %v2230
      %v2232 = vrot.slane %v2231, 1
      %v2233 = vadd.f32 %v2231, %v2232
      %v2234 = vadd.f32 %v2026, %v2028
      %v2235 = vrot.slane %v2234, 4
      %v2236 = vadd.f32 %v2234, %v2235
      %v2237 = vrot.slane %v2236, 2
      %v2238 = vadd.f32 %v2236, %v2237
      %v2239 = vrot.slane %v2238, 1
      %v2240 = vadd.f32 %v2238, %v2239
      %v2241 = vadd.f32 %v2030, %v2032
      %v2242 = vrot.slane %v2241, 4
      %v2243 = vadd.f32 %v2241, %v2242
      %v2244 = vrot.slane %v2243, 2
      %v2245 = vadd.f32 %v2243, %v2244
      %v2246 = vrot.slane %v2245, 1
      %v2247 = vadd.f32 %v2245, %v2246
      %v2248 = vadd.f32 %v2034, %v2036
      %v2249 = vrot.slane %v2248, 4
      %v2250 = vadd.f32 %v2248, %v2249
      %v2251 = vrot.slane %v2250, 2
      %v2252 = vadd.f32 %v2250, %v2251
      %v2253 = vrot.slane %v2252, 1
      %v2254 = vadd.f32 %v2252, %v2253
      %v2255 = vadd.f32 %v2038, %v2040
      %v2256 = vrot.slane %v2255, 4
      %v2257 = vadd.f32 %v2255, %v2256
      %v2258 = vrot.slane %v2257, 2
      %v2259 = vadd.f32 %v2257, %v2258
      %v2260 = vrot.slane %v2259, 1
      %v2261 = vadd.f32 %v2259, %v2260
      %v2262 = vadd.f32 %v2042, %v2044
      %v2263 = vrot.slane %v2262, 4
      %v2264 = vadd.f32 %v2262, %v2263
      %v2265 = vrot.slane %v2264, 2
      %v2266 = vadd.f32 %v2264, %v2265
      %v2267 = vrot.slane %v2266, 1
      %v2268 = vadd.f32 %v2266, %v2267
      %v2269 = vrcp.pop %v2051
      %v2270 = vrcp.pop %v2058
      %v2271 = vrcp.pop %v2065
      %v2272 = vrcp.pop %v2072
      %v2273 = vrcp.pop %v2079
      %v2274 = vrcp.pop %v2086
      %v2275 = vrcp.pop %v2093
      %v2276 = vrcp.pop %v2100
      %v2277 = vrcp.pop %v2107
      %v2278 = vrcp.pop %v2114
      %v2279 = vrcp.pop %v2121
      %v2280 = vrcp.pop %v2128
      %v2281 = vrcp.pop %v2135
      %v2282 = vrcp.pop %v2142
      %v2283 = vrcp.pop %v2149
      %v2284 = vrcp.pop %v2156
      %v2285 = vrcp.pop %v2163
      %v2286 = vrcp.pop %v2170
      %v2287 = vrcp.pop %v2177
      %v2288 = vrcp.pop %v2184
      %v2289 = vrcp.pop %v2191
      %v2290 = vrcp.pop %v2198
      %v2291 = vrcp.pop %v2205
      %v2292 = vrcp.pop %v2212
      %v2293 = vrcp.pop %v2219
      %v2294 = vrcp.pop %v2226
      %v2295 = vrcp.pop %v2233
      %v2296 = vrcp.pop %v2240
      %v2297 = vrcp.pop %v2247
      %v2298 = vrcp.pop %v2254
      %v2299 = vrcp.pop %v2261
      %v2300 = vrcp.pop %v2268
      %v2301 = vmul.f32 %v1918, %v2269
      %v2302 = vmul.f32 %v1920, %v2269
      %v2303 = vmul.f32 %v1922, %v2270
      %v2304 = vmul.f32 %v1924, %v2270
      %v2305 = vmul.f32 %v1926, %v2271
      %v2306 = vmul.f32 %v1928, %v2271
      %v2307 = vmul.f32 %v1930, %v2272
      %v2308 = vmul.f32 %v1932, %v2272
      %v2309 = vmul.f32 %v1934, %v2273
      %v2310 = vmul.f32 %v1936, %v2273
      %v2311 = vmul.f32 %v1938, %v2274
      %v2312 = vmul.f32 %v1940, %v2274
      %v2313 = vmul.f32 %v1942, %v2275
      %v2314 = vmul.f32 %v1944, %v2275
      %v2315 = vmul.f32 %v1946, %v2276
      %v2316 = vmul.f32 %v1948, %v2276
      %v2317 = vmul.f32 %v1950, %v2277
      %v2318 = vmul.f32 %v1952, %v2277
      %v2319 = vmul.f32 %v1954, %v2278
      %v2320 = vmul.f32 %v1956, %v2278
      %v2321 = vmul.f32 %v1958, %v2279
      %v2322 = vmul.f32 %v1960, %v2279
      %v2323 = vmul.f32 %v1962, %v2280
      %v2324 = vmul.f32 %v1964, %v2280
      %v2325 = vmul.f32 %v1966, %v2281
      %v2326 = vmul.f32 %v1968, %v2281
      %v2327 = vmul.f32 %v1970, %v2282
      %v2328 = vmul.f32 %v1972, %v2282
      %v2329 = vmul.f32 %v1974, %v2283
      %v2330 = vmul.f32 %v1976, %v2283
      %v2331 = vmul.f32 %v1978, %v2284
      %v2332 = vmul.f32 %v1980, %v2284
      %v2333 = vmul.f32 %v1982, %v2285
      %v2334 = vmul.f32 %v1984, %v2285
      %v2335 = vmul.f32 %v1986, %v2286
      %v2336 = vmul.f32 %v1988, %v2286
      %v2337 = vmul.f32 %v1990, %v2287
      %v2338 = vmul.f32 %v1992, %v2287
      %v2339 = vmul.f32 %v1994, %v2288
      %v2340 = vmul.f32 %v1996, %v2288
      %v2341 = vmul.f32 %v1998, %v2289
      %v2342 = vmul.f32 %v2000, %v2289
      %v2343 = vmul.f32 %v2002, %v2290
      %v2344 = vmul.f32 %v2004, %v2290
      %v2345 = vmul.f32 %v2006, %v2291
      %v2346 = vmul.f32 %v2008, %v2291
      %v2347 = vmul.f32 %v2010, %v2292
      %v2348 = vmul.f32 %v2012, %v2292
      %v2349 = vmul.f32 %v2014, %v2293
      %v2350 = vmul.f32 %v2016, %v2293
      %v2351 = vmul.f32 %v2018, %v2294
      %v2352 = vmul.f32 %v2020, %v2294
      %v2353 = vmul.f32 %v2022, %v2295
      %v2354 = vmul.f32 %v2024, %v2295
      %v2355 = vmul.f32 %v2026, %v2296
      %v2356 = vmul.f32 %v2028, %v2296
      %v2357 = vmul.f32 %v2030, %v2297
      %v2358 = vmul.f32 %v2032, %v2297
      %v2359 = vmul.f32 %v2034, %v2298
      %v2360 = vmul.f32 %v2036, %v2298
      %v2361 = vmul.f32 %v2038, %v2299
      %v2362 = vmul.f32 %v2040, %v2299
      %v2363 = vmul.f32 %v2042, %v2300
      %v2364 = vmul.f32 %v2044, %v2300
      %v2365 = vmul.f32 %v944, %v2301
      %v2366 = vmul.f32 %v945, %v2302
      %v2367 = vmul.f32 %v946, %v2303
      %v2368 = vmul.f32 %v947, %v2304
      %v2369 = vmul.f32 %v948, %v2305
      %v2370 = vmul.f32 %v949, %v2306
      %v2371 = vmul.f32 %v950, %v2307
      %v2372 = vmul.f32 %v951, %v2308
      %v2373 = vmul.f32 %v952, %v2309
      %v2374 = vmul.f32 %v953, %v2310
      %v2375 = vmul.f32 %v954, %v2311
      %v2376 = vmul.f32 %v955, %v2312
      %v2377 = vmul.f32 %v956, %v2313
      %v2378 = vmul.f32 %v957, %v2314
      %v2379 = vmul.f32 %v958, %v2315
      %v2380 = vmul.f32 %v959, %v2316
      %v2381 = vmul.f32 %v960, %v2317
      %v2382 = vmul.f32 %v961, %v2318
      %v2383 = vmul.f32 %v962, %v2319
      %v2384 = vmul.f32 %v963, %v2320
      %v2385 = vmul.f32 %v964, %v2321
      %v2386 = vmul.f32 %v965, %v2322
      %v2387 = vmul.f32 %v966, %v2323
      %v2388 = vmul.f32 %v967, %v2324
      %v2389 = vmul.f32 %v968, %v2325
      %v2390 = vmul.f32 %v969, %v2326
      %v2391 = vmul.f32 %v970, %v2327
      %v2392 = vmul.f32 %v971, %v2328
      %v2393 = vmul.f32 %v972, %v2329
      %v2394 = vmul.f32 %v973, %v2330
      %v2395 = vmul.f32 %v974, %v2331
      %v2396 = vmul.f32 %v975, %v2332
      %v2397 = vmul.f32 %v976, %v2333
      %v2398 = vmul.f32 %v977, %v2334
      %v2399 = vmul.f32 %v978, %v2335
      %v2400 = vmul.f32 %v979, %v2336
      %v2401 = vmul.f32 %v980, %v2337
      %v2402 = vmul.f32 %v981, %v2338
      %v2403 = vmul.f32 %v982, %v2339
      %v2404 = vmul.f32 %v983, %v2340
      %v2405 = vmul.f32 %v984, %v2341
      %v2406 = vmul.f32 %v985, %v2342
      %v2407 = vmul.f32 %v986, %v2343
      %v2408 = vmul.f32 %v987, %v2344
      %v2409 = vmul.f32 %v988, %v2345
      %v2410 = vmul.f32 %v989, %v2346
      %v2411 = vmul.f32 %v990, %v2347
      %v2412 = vmul.f32 %v991, %v2348
      %v2413 = vmul.f32 %v992, %v2349
      %v2414 = vmul.f32 %v993, %v2350
      %v2415 = vmul.f32 %v994, %v2351
      %v2416 = vmul.f32 %v995, %v2352
      %v2417 = vmul.f32 %v996, %v2353
      %v2418 = vmul.f32 %v997, %v2354
      %v2419 = vmul.f32 %v998, %v2355
      %v2420 = vmul.f32 %v999, %v2356
      %v2421 = vmul.f32 %v1000, %v2357
      %v2422 = vmul.f32 %v1001, %v2358
      %v2423 = vmul.f32 %v1002, %v2359
      %v2424 = vmul.f32 %v1003, %v2360
      %v2425 = vmul.f32 %v1004, %v2361
      %v2426 = vmul.f32 %v1005, %v2362
      %v2427 = vmul.f32 %v1006, %v2363
      %v2428 = vmul.f32 %v1007, %v2364
      %v2429 = vsel %vm1436, %v2365, 0.0
      %v2430 = vsel %vm1436, %v2366, 0.0
      %v2431 = vadd.f32 %v2429, %v2430
      %v2432 = vrot.slane %v2431, 4
      %v2433 = vadd.f32 %v2431, %v2432
      %v2434 = vrot.slane %v2433, 2
      %v2435 = vadd.f32 %v2433, %v2434
      %v2436 = vrot.slane %v2435, 1
      %v2437 = vadd.f32 %v2435, %v2436
      %v2438 = vsel %vm1436, %v2367, 0.0
      %v2439 = vsel %vm1436, %v2368, 0.0
      %v2440 = vadd.f32 %v2438, %v2439
      %v2441 = vrot.slane %v2440, 4
      %v2442 = vadd.f32 %v2440, %v2441
      %v2443 = vrot.slane %v2442, 2
      %v2444 = vadd.f32 %v2442, %v2443
      %v2445 = vrot.slane %v2444, 1
      %v2446 = vadd.f32 %v2444, %v2445
      %v2447 = vsel %vm1436, %v2369, 0.0
      %v2448 = vsel %vm1436, %v2370, 0.0
      %v2449 = vadd.f32 %v2447, %v2448
      %v2450 = vrot.slane %v2449, 4
      %v2451 = vadd.f32 %v2449, %v2450
      %v2452 = vrot.slane %v2451, 2
      %v2453 = vadd.f32 %v2451, %v2452
      %v2454 = vrot.slane %v2453, 1
      %v2455 = vadd.f32 %v2453, %v2454
      %v2456 = vsel %vm1436, %v2371, 0.0
      %v2457 = vsel %vm1436, %v2372, 0.0
      %v2458 = vadd.f32 %v2456, %v2457
      %v2459 = vrot.slane %v2458, 4
      %v2460 = vadd.f32 %v2458, %v2459
      %v2461 = vrot.slane %v2460, 2
      %v2462 = vadd.f32 %v2460, %v2461
      %v2463 = vrot.slane %v2462, 1
      %v2464 = vadd.f32 %v2462, %v2463
      %v2465 = vsel %vm1436, %v2373, 0.0
      %v2466 = vsel %vm1436, %v2374, 0.0
      %v2467 = vadd.f32 %v2465, %v2466
      %v2468 = vrot.slane %v2467, 4
      %v2469 = vadd.f32 %v2467, %v2468
      %v2470 = vrot.slane %v2469, 2
      %v2471 = vadd.f32 %v2469, %v2470
      %v2472 = vrot.slane %v2471, 1
      %v2473 = vadd.f32 %v2471, %v2472
      %v2474 = vsel %vm1436, %v2375, 0.0
      %v2475 = vsel %vm1436, %v2376, 0.0
      %v2476 = vadd.f32 %v2474, %v2475
      %v2477 = vrot.slane %v2476, 4
      %v2478 = vadd.f32 %v2476, %v2477
      %v2479 = vrot.slane %v2478, 2
      %v2480 = vadd.f32 %v2478, %v2479
      %v2481 = vrot.slane %v2480, 1
      %v2482 = vadd.f32 %v2480, %v2481
      %v2483 = vsel %vm1436, %v2377, 0.0
      %v2484 = vsel %vm1436, %v2378, 0.0
      %v2485 = vadd.f32 %v2483, %v2484
      %v2486 = vrot.slane %v2485, 4
      %v2487 = vadd.f32 %v2485, %v2486
      %v2488 = vrot.slane %v2487, 2
      %v2489 = vadd.f32 %v2487, %v2488
      %v2490 = vrot.slane %v2489, 1
      %v2491 = vadd.f32 %v2489, %v2490
      %v2492 = vsel %vm1436, %v2379, 0.0
      %v2493 = vsel %vm1436, %v2380, 0.0
      %v2494 = vadd.f32 %v2492, %v2493
      %v2495 = vrot.slane %v2494, 4
      %v2496 = vadd.f32 %v2494, %v2495
      %v2497 = vrot.slane %v2496, 2
      %v2498 = vadd.f32 %v2496, %v2497
      %v2499 = vrot.slane %v2498, 1
      %v2500 = vadd.f32 %v2498, %v2499
      %v2501 = vsel %vm1436, %v2381, 0.0
      %v2502 = vsel %vm1436, %v2382, 0.0
      %v2503 = vadd.f32 %v2501, %v2502
      %v2504 = vrot.slane %v2503, 4
      %v2505 = vadd.f32 %v2503, %v2504
      %v2506 = vrot.slane %v2505, 2
      %v2507 = vadd.f32 %v2505, %v2506
      %v2508 = vrot.slane %v2507, 1
      %v2509 = vadd.f32 %v2507, %v2508
      %v2510 = vsel %vm1436, %v2383, 0.0
      %v2511 = vsel %vm1436, %v2384, 0.0
      %v2512 = vadd.f32 %v2510, %v2511
      %v2513 = vrot.slane %v2512, 4
      %v2514 = vadd.f32 %v2512, %v2513
      %v2515 = vrot.slane %v2514, 2
      %v2516 = vadd.f32 %v2514, %v2515
      %v2517 = vrot.slane %v2516, 1
      %v2518 = vadd.f32 %v2516, %v2517
      %v2519 = vsel %vm1436, %v2385, 0.0
      %v2520 = vsel %vm1436, %v2386, 0.0
      %v2521 = vadd.f32 %v2519, %v2520
      %v2522 = vrot.slane %v2521, 4
      %v2523 = vadd.f32 %v2521, %v2522
      %v2524 = vrot.slane %v2523, 2
      %v2525 = vadd.f32 %v2523, %v2524
      %v2526 = vrot.slane %v2525, 1
      %v2527 = vadd.f32 %v2525, %v2526
      %v2528 = vsel %vm1436, %v2387, 0.0
      %v2529 = vsel %vm1436, %v2388, 0.0
      %v2530 = vadd.f32 %v2528, %v2529
      %v2531 = vrot.slane %v2530, 4
      %v2532 = vadd.f32 %v2530, %v2531
      %v2533 = vrot.slane %v2532, 2
      %v2534 = vadd.f32 %v2532, %v2533
      %v2535 = vrot.slane %v2534, 1
      %v2536 = vadd.f32 %v2534, %v2535
      %v2537 = vsel %vm1436, %v2389, 0.0
      %v2538 = vsel %vm1436, %v2390, 0.0
      %v2539 = vadd.f32 %v2537, %v2538
      %v2540 = vrot.slane %v2539, 4
      %v2541 = vadd.f32 %v2539, %v2540
      %v2542 = vrot.slane %v2541, 2
      %v2543 = vadd.f32 %v2541, %v2542
      %v2544 = vrot.slane %v2543, 1
      %v2545 = vadd.f32 %v2543, %v2544
      %v2546 = vsel %vm1436, %v2391, 0.0
      %v2547 = vsel %vm1436, %v2392, 0.0
      %v2548 = vadd.f32 %v2546, %v2547
      %v2549 = vrot.slane %v2548, 4
      %v2550 = vadd.f32 %v2548, %v2549
      %v2551 = vrot.slane %v2550, 2
      %v2552 = vadd.f32 %v2550, %v2551
      %v2553 = vrot.slane %v2552, 1
      %v2554 = vadd.f32 %v2552, %v2553
      %v2555 = vsel %vm1436, %v2393, 0.0
      %v2556 = vsel %vm1436, %v2394, 0.0
      %v2557 = vadd.f32 %v2555, %v2556
      %v2558 = vrot.slane %v2557, 4
      %v2559 = vadd.f32 %v2557, %v2558
      %v2560 = vrot.slane %v2559, 2
      %v2561 = vadd.f32 %v2559, %v2560
      %v2562 = vrot.slane %v2561, 1
      %v2563 = vadd.f32 %v2561, %v2562
      %v2564 = vsel %vm1436, %v2395, 0.0
      %v2565 = vsel %vm1436, %v2396, 0.0
      %v2566 = vadd.f32 %v2564, %v2565
      %v2567 = vrot.slane %v2566, 4
      %v2568 = vadd.f32 %v2566, %v2567
      %v2569 = vrot.slane %v2568, 2
      %v2570 = vadd.f32 %v2568, %v2569
      %v2571 = vrot.slane %v2570, 1
      %v2572 = vadd.f32 %v2570, %v2571
      %v2573 = vsel %vm1436, %v2397, 0.0
      %v2574 = vsel %vm1436, %v2398, 0.0
      %v2575 = vadd.f32 %v2573, %v2574
      %v2576 = vrot.slane %v2575, 4
      %v2577 = vadd.f32 %v2575, %v2576
      %v2578 = vrot.slane %v2577, 2
      %v2579 = vadd.f32 %v2577, %v2578
      %v2580 = vrot.slane %v2579, 1
      %v2581 = vadd.f32 %v2579, %v2580
      %v2582 = vsel %vm1436, %v2399, 0.0
      %v2583 = vsel %vm1436, %v2400, 0.0
      %v2584 = vadd.f32 %v2582, %v2583
      %v2585 = vrot.slane %v2584, 4
      %v2586 = vadd.f32 %v2584, %v2585
      %v2587 = vrot.slane %v2586, 2
      %v2588 = vadd.f32 %v2586, %v2587
      %v2589 = vrot.slane %v2588, 1
      %v2590 = vadd.f32 %v2588, %v2589
      %v2591 = vsel %vm1436, %v2401, 0.0
      %v2592 = vsel %vm1436, %v2402, 0.0
      %v2593 = vadd.f32 %v2591, %v2592
      %v2594 = vrot.slane %v2593, 4
      %v2595 = vadd.f32 %v2593, %v2594
      %v2596 = vrot.slane %v2595, 2
      %v2597 = vadd.f32 %v2595, %v2596
      %v2598 = vrot.slane %v2597, 1
      %v2599 = vadd.f32 %v2597, %v2598
      %v2600 = vsel %vm1436, %v2403, 0.0
      %v2601 = vsel %vm1436, %v2404, 0.0
      %v2602 = vadd.f32 %v2600, %v2601
      %v2603 = vrot.slane %v2602, 4
      %v2604 = vadd.f32 %v2602, %v2603
      %v2605 = vrot.slane %v2604, 2
      %v2606 = vadd.f32 %v2604, %v2605
      %v2607 = vrot.slane %v2606, 1
      %v2608 = vadd.f32 %v2606, %v2607
      %v2609 = vsel %vm1436, %v2405, 0.0
      %v2610 = vsel %vm1436, %v2406, 0.0
      %v2611 = vadd.f32 %v2609, %v2610
      %v2612 = vrot.slane %v2611, 4
      %v2613 = vadd.f32 %v2611, %v2612
      %v2614 = vrot.slane %v2613, 2
      %v2615 = vadd.f32 %v2613, %v2614
      %v2616 = vrot.slane %v2615, 1
      %v2617 = vadd.f32 %v2615, %v2616
      %v2618 = vsel %vm1436, %v2407, 0.0
      %v2619 = vsel %vm1436, %v2408, 0.0
      %v2620 = vadd.f32 %v2618, %v2619
      %v2621 = vrot.slane %v2620, 4
      %v2622 = vadd.f32 %v2620, %v2621
      %v2623 = vrot.slane %v2622, 2
      %v2624 = vadd.f32 %v2622, %v2623
      %v2625 = vrot.slane %v2624, 1
      %v2626 = vadd.f32 %v2624, %v2625
      %v2627 = vsel %vm1436, %v2409, 0.0
      %v2628 = vsel %vm1436, %v2410, 0.0
      %v2629 = vadd.f32 %v2627, %v2628
      %v2630 = vrot.slane %v2629, 4
      %v2631 = vadd.f32 %v2629, %v2630
      %v2632 = vrot.slane %v2631, 2
      %v2633 = vadd.f32 %v2631, %v2632
      %v2634 = vrot.slane %v2633, 1
      %v2635 = vadd.f32 %v2633, %v2634
      %v2636 = vsel %vm1436, %v2411, 0.0
      %v2637 = vsel %vm1436, %v2412, 0.0
      %v2638 = vadd.f32 %v2636, %v2637
      %v2639 = vrot.slane %v2638, 4
      %v2640 = vadd.f32 %v2638, %v2639
      %v2641 = vrot.slane %v2640, 2
      %v2642 = vadd.f32 %v2640, %v2641
      %v2643 = vrot.slane %v2642, 1
      %v2644 = vadd.f32 %v2642, %v2643
      %v2645 = vsel %vm1436, %v2413, 0.0
      %v2646 = vsel %vm1436, %v2414, 0.0
      %v2647 = vadd.f32 %v2645, %v2646
      %v2648 = vrot.slane %v2647, 4
      %v2649 = vadd.f32 %v2647, %v2648
      %v2650 = vrot.slane %v2649, 2
      %v2651 = vadd.f32 %v2649, %v2650
      %v2652 = vrot.slane %v2651, 1
      %v2653 = vadd.f32 %v2651, %v2652
      %v2654 = vsel %vm1436, %v2415, 0.0
      %v2655 = vsel %vm1436, %v2416, 0.0
      %v2656 = vadd.f32 %v2654, %v2655
      %v2657 = vrot.slane %v2656, 4
      %v2658 = vadd.f32 %v2656, %v2657
      %v2659 = vrot.slane %v2658, 2
      %v2660 = vadd.f32 %v2658, %v2659
      %v2661 = vrot.slane %v2660, 1
      %v2662 = vadd.f32 %v2660, %v2661
      %v2663 = vsel %vm1436, %v2417, 0.0
      %v2664 = vsel %vm1436, %v2418, 0.0
      %v2665 = vadd.f32 %v2663, %v2664
      %v2666 = vrot.slane %v2665, 4
      %v2667 = vadd.f32 %v2665, %v2666
      %v2668 = vrot.slane %v2667, 2
      %v2669 = vadd.f32 %v2667, %v2668
      %v2670 = vrot.slane %v2669, 1
      %v2671 = vadd.f32 %v2669, %v2670
      %v2672 = vsel %vm1436, %v2419, 0.0
      %v2673 = vsel %vm1436, %v2420, 0.0
      %v2674 = vadd.f32 %v2672, %v2673
      %v2675 = vrot.slane %v2674, 4
      %v2676 = vadd.f32 %v2674, %v2675
      %v2677 = vrot.slane %v2676, 2
      %v2678 = vadd.f32 %v2676, %v2677
      %v2679 = vrot.slane %v2678, 1
      %v2680 = vadd.f32 %v2678, %v2679
      %v2681 = vsel %vm1436, %v2421, 0.0
      %v2682 = vsel %vm1436, %v2422, 0.0
      %v2683 = vadd.f32 %v2681, %v2682
      %v2684 = vrot.slane %v2683, 4
      %v2685 = vadd.f32 %v2683, %v2684
      %v2686 = vrot.slane %v2685, 2
      %v2687 = vadd.f32 %v2685, %v2686
      %v2688 = vrot.slane %v2687, 1
      %v2689 = vadd.f32 %v2687, %v2688
      %v2690 = vsel %vm1436, %v2423, 0.0
      %v2691 = vsel %vm1436, %v2424, 0.0
      %v2692 = vadd.f32 %v2690, %v2691
      %v2693 = vrot.slane %v2692, 4
      %v2694 = vadd.f32 %v2692, %v2693
      %v2695 = vrot.slane %v2694, 2
      %v2696 = vadd.f32 %v2694, %v2695
      %v2697 = vrot.slane %v2696, 1
      %v2698 = vadd.f32 %v2696, %v2697
      %v2699 = vsel %vm1436, %v2425, 0.0
      %v2700 = vsel %vm1436, %v2426, 0.0
      %v2701 = vadd.f32 %v2699, %v2700
      %v2702 = vrot.slane %v2701, 4
      %v2703 = vadd.f32 %v2701, %v2702
      %v2704 = vrot.slane %v2703, 2
      %v2705 = vadd.f32 %v2703, %v2704
      %v2706 = vrot.slane %v2705, 1
      %v2707 = vadd.f32 %v2705, %v2706
      %v2708 = vsel %vm1436, %v2427, 0.0
      %v2709 = vsel %vm1436, %v2428, 0.0
      %v2710 = vadd.f32 %v2708, %v2709
      %v2711 = vrot.slane %v2710, 4
      %v2712 = vadd.f32 %v2710, %v2711
      %v2713 = vrot.slane %v2712, 2
      %v2714 = vadd.f32 %v2712, %v2713
      %v2715 = vrot.slane %v2714, 1
      %v2716 = vadd.f32 %v2714, %v2715
      %v2717 = vtanh.pop %v2437
      %v2718 = vtanh.pop %v2446
      %v2719 = vtanh.pop %v2455
      %v2720 = vtanh.pop %v2464
      %v2721 = vtanh.pop %v2473
      %v2722 = vtanh.pop %v2482
      %v2723 = vtanh.pop %v2491
      %v2724 = vtanh.pop %v2500
      %v2725 = vtanh.pop %v2509
      %v2726 = vtanh.pop %v2518
      %v2727 = vtanh.pop %v2527
      %v2728 = vtanh.pop %v2536
      %v2729 = vtanh.pop %v2545
      %v2730 = vtanh.pop %v2554
      %v2731 = vtanh.pop %v2563
      %v2732 = vtanh.pop %v2572
      %v2733 = vtanh.pop %v2581
      %v2734 = vtanh.pop %v2590
      %v2735 = vtanh.pop %v2599
      %v2736 = vtanh.pop %v2608
      %v2737 = vtanh.pop %v2617
      %v2738 = vtanh.pop %v2626
      %v2739 = vtanh.pop %v2635
      %v2740 = vtanh.pop %v2644
      %v2741 = vtanh.pop %v2653
      %v2742 = vtanh.pop %v2662
      %v2743 = vtanh.pop %v2671
      %v2744 = vtanh.pop %v2680
      %v2745 = vtanh.pop %v2689
      %v2746 = vtanh.pop %v2698
      %v2747 = vtanh.pop %v2707
      %v2748 = vtanh.pop %v2716
      %vm2781 = vcmask 1041409
      %v2782 = vsel %vm2781, %v2718, %v2717
      %vm2783 = vcmask 1042434
      %v2784 = vsel %vm2783, %v2719, %v2782
      %vm2785 = vcmask 1043459
      %v2786 = vsel %vm2785, %v2720, %v2784
      %vm2787 = vcmask 1044484
      %v2788 = vsel %vm2787, %v2721, %v2786
      %vm2789 = vcmask 1045509
      %v2790 = vsel %vm2789, %v2722, %v2788
      %vm2791 = vcmask 1046534
      %v2792 = vsel %vm2791, %v2723, %v2790
      %vm2793 = vcmask 1047559
      %v2794 = vsel %vm2793, %v2724, %v2792
      %v2795 = vsel %vm2781, %v2726, %v2725
      %v2796 = vsel %vm2783, %v2727, %v2795
      %v2797 = vsel %vm2785, %v2728, %v2796
      %v2798 = vsel %vm2787, %v2729, %v2797
      %v2799 = vsel %vm2789, %v2730, %v2798
      %v2800 = vsel %vm2791, %v2731, %v2799
      %v2801 = vsel %vm2793, %v2732, %v2800
      %v2802 = vsel %vm2781, %v2734, %v2733
      %v2803 = vsel %vm2783, %v2735, %v2802
      %v2804 = vsel %vm2785, %v2736, %v2803
      %v2805 = vsel %vm2787, %v2737, %v2804
      %v2806 = vsel %vm2789, %v2738, %v2805
      %v2807 = vsel %vm2791, %v2739, %v2806
      %v2808 = vsel %vm2793, %v2740, %v2807
      %v2809 = vsel %vm2781, %v2742, %v2741
      %v2810 = vsel %vm2783, %v2743, %v2809
      %v2811 = vsel %vm2785, %v2744, %v2810
      %v2812 = vsel %vm2787, %v2745, %v2811
      %v2813 = vsel %vm2789, %v2746, %v2812
      %v2814 = vsel %vm2791, %v2747, %v2813
      %v2815 = vsel %vm2793, %v2748, %v2814
      %2820 = vst.msk [vmem:[%s276] sm:$0xff] %vm1436, %v2794
      %2821 = vst.msk [vmem:[%s276 + $0x8] sm:$0xff] %vm1436, %v2801
      %2822 = vst.msk [vmem:[%s276 + $0x10] sm:$0xff] %vm1436, %v2808
      %2823 = vst.msk [vmem:[%s276 + $0x18] sm:$0xff] %vm1436, %v2815
      %s2824 = smul.u32 4, %s22
      %p2825 = scmp.lt.s32.totalorder %s2824, 19
      %s2826 = scalar_select %p2825, %s2824, 19
      %s2827 = smul.addr %s2826, 8
      %s2828 = scalar_lea.vmem %s5, %s2827
      // Predicated region
      $region37: #{tpu_custom_call.1} parent=35 // pred_check
        %p2829 = pneg %p148
      $region38: #{tpu_custom_call.1} parent=35 // pred_check_branch
        %2831 = sbr.rel (%p2829) target = $region40
      $region39: #{tpu_custom_call.1} parent=35 // pred_region
        %s2832 = smul.u32 4, %s22
      $region40: #{tpu_custom_call.1} parent=35 // pred_fallthru
        _
    $region36: #{tpu_custom_call.1} parent=5 // pred_fallthru
      _
    %p2833 = scmp.le.s32.totalorder 2, %s17
    // Predicated region
    $region41: #{tpu_custom_call.1} parent=5 // pred_check
      %p2834 = pneg %p2833
    $region42: #{tpu_custom_call.1} parent=5 // pred_check_branch
      %2836 = sbr.rel (%p2834) target = $region44
    $region43: #{tpu_custom_call.1} parent=5 // pred_region
      %s2837 = ssub.s32 %s17, 2
      // Predicated region
      $region45: #{tpu_custom_call.1} parent=43 // pred_check
        %p2838 = pneg %p154
      $region46: #{tpu_custom_call.1} parent=43 // pred_check_branch
        %2840 = sbr.rel (%p2838) target = $region48
      $region47: #{tpu_custom_call.1} parent=43 // pred_region
        %s2841 = smul.u32 4, %s23
        %p2842 = scmp.lt.s32.totalorder %s2841, 19
        %s2843 = scalar_select %p2842, %s2841, 19
        %s2844 = smul.addr %s2843, 8
        %s2845 = scalar_lea.vmem %s5, %s2844
      $region48: #{tpu_custom_call.1} parent=43 // pred_fallthru
        _
    $region44: #{tpu_custom_call.1} parent=5 // pred_fallthru
      _
  $region6: #{tpu_custom_call.1} parent=0 // loop_footer
    %s21 = sadd.s32 1, %s17
  $region7: #{tpu_custom_call.1} parent=0 // loop_footer_branch
    %16 = sbr.rel target = $region3
  $region8: #{tpu_custom_call.1} parent=0 // loop_exit
    _

</llo_original>
